<compile_context>
chip_gen: v5e
topology: v5e:2x2
jax: 0.10.0
libtpu: 0.0.40
codegen_flags: <defaults>
</compile_context>

<pallas_src>
import jax
import jax.numpy as jnp
import numpy as np
from jax.experimental import pallas as pl
from jax.experimental.pallas import tpu as pltpu

BN_EPS = 0.8          # nn.BatchNorm2d(out_features, 0.8) -> eps = 0.8
LRELU_SLOPE = 0.2     # nn.LeakyReLU(0.2)

TM_TARGET = 1024                  # row-tile target; ~6 MiB double-buffered VMEM
VMEM_LIMIT = 32 * 1024 * 1024     # safe scoped-VMEM budget on v5e/v6e/v7x


def _round_up(x, m):
    return (x + m - 1) // m * m


def _row_tiling(m, target=TM_TARGET):
    """(tile, padded_m, n_tiles): minimal padding; >=2 tiles when m >= 16 so the
    'parallel' grid axis can be sharded across v7x's two TensorCores."""
    if m >= 16:
        n_tiles = max(2, -(-m // target))
    else:
        n_tiles = 1
    tile = _round_up(-(-m // n_tiles), 8)
    return tile, tile * n_tiles, n_tiles


# ----------------------------------------------------------------------------
# Pallas kernels
# ----------------------------------------------------------------------------
def _conv_block_kernel(x_ref, w_ref, p_ref, o_ref):
    """(TM, K) x (K, N) full-K matmul + fused bias / LeakyReLU / BN epilogue."""
    # bf16 x bf16 -> f32 on the MXU; no accumulator scratch (single K block).
    y = jnp.dot(x_ref[...], w_ref[...], preferred_element_type=jnp.float32)
    y = y + p_ref[0:1, :]                        # conv bias            (f32)
    y = jnp.where(y > 0, y, LRELU_SLOPE * y)     # LeakyReLU(0.2)
    # Dropout2d(0.25): identity in eval mode.
    y = y * p_ref[1:2, :] + p_ref[2:3, :]        # folded BatchNorm2d(eps=0.8)
    o_ref[...] = y.astype(o_ref.dtype)           # single cast on store


def _head_kernel(x_ref, w_ref, b_ref, o_ref):
    """Linear(., 1) + Sigmoid as a VPU broadcast-mul + lane reduction."""
    x = x_ref[...].astype(jnp.float32)                    # (TB, K)
    z = jnp.sum(x * w_ref[...], axis=-1, keepdims=True)   # (TB, 1)
    z = z + b_ref[...]
    e = jnp.exp(-jnp.abs(z))                              # stable sigmoid (EUP)
    sig = jnp.where(z >= 0, 1.0 / (1.0 + e), e / (1.0 + e))
    o_ref[...] = sig.astype(o_ref.dtype)


# ----------------------------------------------------------------------------
# pallas_call wrappers
# ----------------------------------------------------------------------------
def _conv_block(x2d, w2d, pack):
    """x2d: (M, K) bf16 patches; w2d: (K, N) bf16; pack: (3, N) f32 = [bias, scale, shift]."""
    M, K = x2d.shape
    N = w2d.shape[1]
    TM, M_pad, n_tiles = _row_tiling(M)
    x_p = jnp.pad(x2d, ((0, M_pad - M), (0, 0))) if M_pad != M else x2d

    y = pl.pallas_call(
        _conv_block_kernel,
        out_shape=jax.ShapeDtypeStruct((M_pad, N), jnp.bfloat16),
        grid_spec=pltpu.PrefetchScalarGridSpec(
            num_scalar_prefetch=0,
            grid=(n_tiles,),
            in_specs=[
                pl.BlockSpec((TM, K), lambda i: (i, 0)),   # patch tile (full K)
                pl.BlockSpec((K, N), lambda i: (0, 0)),    # weights (resident)
                pl.BlockSpec((3, N), lambda i: (0, 0)),    # bias/scale/shift pack
            ],
            out_specs=pl.BlockSpec((TM, N), lambda i: (i, 0)),  # true-N output
        ),
        compiler_params=pltpu.CompilerParams(
            dimension_semantics=("parallel",),
            vmem_limit_bytes=VMEM_LIMIT),
    )(x_p, w2d, pack)
    return y[:M] if M_pad != M else y


def _head(flat, w_row, bias):
    """flat: (B, K) bf16, w_row: (1, K) f32 (NHWC-ordered), bias: (1, 1) f32 -> (B, 1) f32."""
    B, K = flat.shape
    TB, B_pad, n_tiles = _row_tiling(B)
    flat_p = jnp.pad(flat, ((0, B_pad - B), (0, 0))) if B_pad != B else flat

    y = pl.pallas_call(
        _head_kernel,
        out_shape=jax.ShapeDtypeStruct((B_pad, 1), jnp.float32),
        grid_spec=pltpu.PrefetchScalarGridSpec(
            num_scalar_prefetch=0,
            grid=(n_tiles,),
            in_specs=[
                pl.BlockSpec((TB, K), lambda i: (i, 0)),
                pl.BlockSpec((1, K), lambda i: (0, 0)),
                pl.BlockSpec((1, 1), lambda i: (0, 0)),
            ],
            out_specs=pl.BlockSpec((TB, 1), lambda i: (i, 0)),
        ),
        compiler_params=pltpu.CompilerParams(
            dimension_semantics=("parallel",),
            vmem_limit_bytes=VMEM_LIMIT),
    )(flat_p, w_row, bias)
    return y[:B] if B_pad != B else y


# ----------------------------------------------------------------------------
# Glue: im2col for Conv2d(kernel=4, stride=2, padding=1), NHWC (bf16)
# ----------------------------------------------------------------------------
def _im2col_4x4_s2_p1(x_nhwc):
    B, H, W, C = x_nhwc.shape
    Ho, Wo = H // 2, W // 2
    xp = jnp.pad(x_nhwc, ((0, 0), (1, 1), (1, 1), (0, 0)))
    patches = []
    for kh in range(4):
        for kw in range(4):
            patches.append(xp[:, kh:kh + 2 * Ho:2, kw:kw + 2 * Wo:2, :])
    # (B, Ho, Wo, 16, C)  -> K dim ordered (kh, kw, Cin)
    stacked = jnp.stack(patches, axis=3)
    return stacked.reshape(B * Ho * Wo, 16 * C), (B, Ho, Wo)


# ----------------------------------------------------------------------------
# Parameter construction (deterministic, shapes from the PyTorch __init__)
# ----------------------------------------------------------------------------
def init_params(key, channels, img_size):
    chans = [channels, 16, 32, 64, 128]
    params = {"blocks": []}
    for i in range(4):
        cin, cout = chans[i], chans[i + 1]
        key, k_w, k_b, k_g, k_be, k_m, k_v = jax.random.split(key, 7)
        w = jax.random.normal(k_w, (cout, cin, 4, 4), jnp.float32) * 0.05
        b = jax.random.normal(k_b, (cout,), jnp.float32) * 0.05
        gamma = 1.0 + 0.1 * jax.random.normal(k_g, (cout,), jnp.float32)
        beta = 0.1 * jax.random.normal(k_be, (cout,), jnp.float32)
        mean = 0.1 * jax.random.normal(k_m, (cout,), jnp.float32)
        var = 0.5 + jnp.abs(jax.random.normal(k_v, (cout,), jnp.float32))
        params["blocks"].append(dict(w=w, b=b, gamma=gamma, beta=beta,
                                     mean=mean, var=var))
    down = img_size // (2 ** 4)
    key, k_lw, k_lb = jax.random.split(key, 3)
    lin_w = jax.random.normal(
        k_lw, (1, 128 * down * down), jnp.float32) * 0.05   # PyTorch (out, in), NCHW order
    params["lin_w"] = lin_w
    params["lin_b"] = jax.random.normal(k_lb, (1,), jnp.float32) * 0.05
    # One-time column permutation: NCHW-flatten order -> NHWC-flatten order, so the
    # forward pass can flatten the last NHWC activation directly (no transpose).
    perm = np.arange(128 * down * down).reshape(128, down, down)
    perm = perm.transpose(1, 2, 0).reshape(-1)
    params["lin_w_nhwc"] = lin_w[:, perm]
    return params


# ----------------------------------------------------------------------------
# Forward pass
# ----------------------------------------------------------------------------
@jax.jit
def discriminator_forward(img_nchw, params):
    # NCHW -> NHWC; bf16 activations halve HBM traffic (MXU accumulates in f32).
    x = jnp.transpose(img_nchw, (0, 2, 3, 1)).astype(jnp.bfloat16)
    for blk in params["blocks"]:
        x2d, (B, Ho, Wo) = _im2col_4x4_s2_p1(x)
        cout = blk["w"].shape[0]
        # (Cout, Cin, 4, 4) -> (4, 4, Cin, Cout) -> (16*Cin, Cout): matches the
        # (kh, kw, Cin) K-ordering of the patches.
        w2d = jnp.transpose(blk["w"], (2, 3, 1, 0)).reshape(-1, cout)
        w2d = w2d.astype(jnp.bfloat16)
        # Pre-fold BatchNorm2d(eps=0.8) running stats into scale/shift; pack with
        # the conv bias into one (3, Cout) f32 array -> a single kernel operand.
        scale = blk["gamma"] * jax.lax.rsqrt(blk["var"] + BN_EPS)
        shift = blk["beta"] - blk["mean"] * scale
        pack = jnp.stack([blk["b"], scale, shift], axis=0)
        y2d = _conv_block(x2d, w2d, pack)
        x = y2d.reshape(B, Ho, Wo, cout)
    # Flatten directly in NHWC order; lin_w_nhwc was permuted once at init so the
    # result equals PyTorch's NCHW view(B, -1) @ lin_w.T.
    B = x.shape[0]
    flat = x.reshape(B, -1)
    b = params["lin_b"].reshape(1, 1)
    return _head(flat, params["lin_w_nhwc"], b)   # (B, 1), sigmoid in-kernel


if __name__ == "__main__":
    batch, channels, img_size = 2, 4, 16
    key = jax.random.PRNGKey(0)
    key, k_img = jax.random.split(key)
    img = jax.random.normal(k_img, (batch, channels, img_size, img_size),
                            jnp.float32)
    params = init_params(key, channels, img_size)

    out = discriminator_forward(img, params)
    out = jax.block_until_ready(out)
    assert out.shape == (batch, 1)
    assert bool(jnp.all((out >= 0.0) & (out <= 1.0)))
    print("KERNEL_OK")
</pallas_src>

<mosaic_0001>
module attributes {stable_mosaic.version = 11 : i64} {
  func.func @_conv_block_kernel(%arg0: i32, %arg1: memref<64x64xbf16, #tpu.memory_space<vmem>>, %arg2: memref<64x16xbf16, #tpu.memory_space<vmem>>, %arg3: memref<3x16xf32, #tpu.memory_space<vmem>>, %arg4: memref<64x16xbf16, #tpu.memory_space<vmem>>) attributes {dimension_semantics = [#tpu.dimension_semantics<parallel>], iteration_bounds = array<i64: 2>, scalar_prefetch = 0 : i64, scratch_operands = 0 : i64, tpu.core_type = #tpu.core_type<tc>, window_params = [{transform_indices = @transform_0, window_bounds = array<i64: 64, 64>}, {pipeline_mode = #tpu.pipeline_mode<synchronous>, transform_indices = @transform_1, window_bounds = array<i64: 64, 16>}, {pipeline_mode = #tpu.pipeline_mode<synchronous>, transform_indices = @transform_2, window_bounds = array<i64: 3, 16>}, {transform_indices = @transform_3, window_bounds = array<i64: 64, 16>}]} {
    %c0 = arith.constant 0 : index
    %c0_0 = arith.constant 0 : index
    %0 = vector.load %arg1[%c0, %c0_0] : memref<64x64xbf16, #tpu.memory_space<vmem>>, vector<64x64xbf16>
    %c0_1 = arith.constant 0 : index
    %c0_2 = arith.constant 0 : index
    %1 = vector.load %arg2[%c0_1, %c0_2] : memref<64x16xbf16, #tpu.memory_space<vmem>>, vector<64x16xbf16>
    %cst = arith.constant dense<0.000000e+00> : vector<64x16xf32>
    %2 = tpu.matmul %0, %1, %cst {dimension_numbers = #tpu.dot_dimension_numbers<[1], [0], [0], [1], [0, 0, 1, 1], [], []>} : vector<64x64xbf16>, vector<64x16xbf16>, vector<64x16xf32> -> vector<64x16xf32>
    %c0_3 = arith.constant 0 : index
    %c0_4 = arith.constant 0 : index
    %3 = vector.load %arg3[%c0_3, %c0_4] : memref<3x16xf32, #tpu.memory_space<vmem>>, vector<1x16xf32>
    %4 = vector.broadcast %3 : vector<1x16xf32> to vector<64x16xf32>
    %5 = arith.addf %2, %4 : vector<64x16xf32>
    %cst_5 = arith.constant 0.000000e+00 : f32
    %6 = vector.broadcast %cst_5 : f32 to vector<64x16xf32>
    %7 = arith.cmpf ogt, %5, %6 : vector<64x16xf32>
    %cst_6 = arith.constant 2.000000e-01 : f32
    %8 = vector.broadcast %cst_6 : f32 to vector<64x16xf32>
    %9 = arith.mulf %8, %5 : vector<64x16xf32>
    %10 = arith.select %7, %5, %9 : vector<64x16xi1>, vector<64x16xf32>
    %c1 = arith.constant 1 : index
    %c0_7 = arith.constant 0 : index
    %11 = vector.load %arg3[%c1, %c0_7] : memref<3x16xf32, #tpu.memory_space<vmem>>, vector<1x16xf32>
    %12 = vector.broadcast %11 : vector<1x16xf32> to vector<64x16xf32>
    %13 = arith.mulf %10, %12 : vector<64x16xf32>
    %c2 = arith.constant 2 : index
    %c0_8 = arith.constant 0 : index
    %14 = vector.load %arg3[%c2, %c0_8] : memref<3x16xf32, #tpu.memory_space<vmem>>, vector<1x16xf32>
    %15 = vector.broadcast %14 : vector<1x16xf32> to vector<64x16xf32>
    %16 = arith.addf %13, %15 : vector<64x16xf32>
    %17 = arith.truncf %16 : vector<64x16xf32> to vector<64x16xbf16>
    %c0_9 = arith.constant 0 : index
    %c0_10 = arith.constant 0 : index
    %18 = vector.load %arg4[%c0_9, %c0_10] : memref<64x16xbf16, #tpu.memory_space<vmem>>, vector<64x16xbf16>
    tpu.vector_store %arg4[%c0_9, %c0_10], %17 {strides = array<i32>} : memref<64x16xbf16, #tpu.memory_space<vmem>>, vector<64x16xbf16>,
    return
  }
  func.func @transform_0(%arg0: i32) -> (i32, i32) {
    %c0_i32 = arith.constant 0 : i32
    %c0_i32_0 = arith.constant 0 : i32
    return %arg0, %c0_i32 : i32, i32
  }
  func.func @transform_1(%arg0: i32) -> (i32, i32) {
    %c0_i32 = arith.constant 0 : i32
    %c0_i32_0 = arith.constant 0 : i32
    %c0_i32_1 = arith.constant 0 : i32
    return %c0_i32, %c0_i32_0 : i32, i32
  }
  func.func @transform_2(%arg0: i32) -> (i32, i32) {
    %c0_i32 = arith.constant 0 : i32
    %c0_i32_0 = arith.constant 0 : i32
    %c0_i32_1 = arith.constant 0 : i32
    return %c0_i32, %c0_i32_0 : i32, i32
  }
  func.func @transform_3(%arg0: i32) -> (i32, i32) {
    %c0_i32 = arith.constant 0 : i32
    %c0_i32_0 = arith.constant 0 : i32
    return %arg0, %c0_i32 : i32, i32
  }
}

module attributes {stable_mosaic.version = 11 : i64} {
  func.func @_conv_block_kernel(%arg0: i32, %arg1: memref<16x256xbf16, #tpu.memory_space<vmem>>, %arg2: memref<256x32xbf16, #tpu.memory_space<vmem>>, %arg3: memref<3x32xf32, #tpu.memory_space<vmem>>, %arg4: memref<16x32xbf16, #tpu.memory_space<vmem>>) attributes {dimension_semantics = [#tpu.dimension_semantics<parallel>], iteration_bounds = array<i64: 2>, scalar_prefetch = 0 : i64, scratch_operands = 0 : i64, tpu.core_type = #tpu.core_type<tc>, window_params = [{transform_indices = @transform_0, window_bounds = array<i64: 16, 256>}, {pipeline_mode = #tpu.pipeline_mode<synchronous>, transform_indices = @transform_1, window_bounds = array<i64: 256, 32>}, {pipeline_mode = #tpu.pipeline_mode<synchronous>, transform_indices = @transform_2, window_bounds = array<i64: 3, 32>}, {transform_indices = @transform_3, window_bounds = array<i64: 16, 32>}]} {
    %c0 = arith.constant 0 : index
    %c0_0 = arith.constant 0 : index
    %0 = vector.load %arg1[%c0, %c0_0] : memref<16x256xbf16, #tpu.memory_space<vmem>>, vector<16x256xbf16>
    %c0_1 = arith.constant 0 : index
    %c0_2 = arith.constant 0 : index
    %1 = vector.load %arg2[%c0_1, %c0_2] : memref<256x32xbf16, #tpu.memory_space<vmem>>, vector<256x32xbf16>
    %cst = arith.constant dense<0.000000e+00> : vector<16x32xf32>
    %2 = tpu.matmul %0, %1, %cst {dimension_numbers = #tpu.dot_dimension_numbers<[1], [0], [0], [1], [0, 0, 1, 1], [], []>} : vector<16x256xbf16>, vector<256x32xbf16>, vector<16x32xf32> -> vector<16x32xf32>
    %c0_3 = arith.constant 0 : index
    %c0_4 = arith.constant 0 : index
    %3 = vector.load %arg3[%c0_3, %c0_4] : memref<3x32xf32, #tpu.memory_space<vmem>>, vector<1x32xf32>
    %4 = vector.broadcast %3 : vector<1x32xf32> to vector<16x32xf32>
    %5 = arith.addf %2, %4 : vector<16x32xf32>
    %cst_5 = arith.constant 0.000000e+00 : f32
    %6 = vector.broadcast %cst_5 : f32 to vector<16x32xf32>
    %7 = arith.cmpf ogt, %5, %6 : vector<16x32xf32>
    %cst_6 = arith.constant 2.000000e-01 : f32
    %8 = vector.broadcast %cst_6 : f32 to vector<16x32xf32>
    %9 = arith.mulf %8, %5 : vector<16x32xf32>
    %10 = arith.select %7, %5, %9 : vector<16x32xi1>, vector<16x32xf32>
    %c1 = arith.constant 1 : index
    %c0_7 = arith.constant 0 : index
    %11 = vector.load %arg3[%c1, %c0_7] : memref<3x32xf32, #tpu.memory_space<vmem>>, vector<1x32xf32>
    %12 = vector.broadcast %11 : vector<1x32xf32> to vector<16x32xf32>
    %13 = arith.mulf %10, %12 : vector<16x32xf32>
    %c2 = arith.constant 2 : index
    %c0_8 = arith.constant 0 : index
    %14 = vector.load %arg3[%c2, %c0_8] : memref<3x32xf32, #tpu.memory_space<vmem>>, vector<1x32xf32>
    %15 = vector.broadcast %14 : vector<1x32xf32> to vector<16x32xf32>
    %16 = arith.addf %13, %15 : vector<16x32xf32>
    %17 = arith.truncf %16 : vector<16x32xf32> to vector<16x32xbf16>
    %c0_9 = arith.constant 0 : index
    %c0_10 = arith.constant 0 : index
    %18 = vector.load %arg4[%c0_9, %c0_10] : memref<16x32xbf16, #tpu.memory_space<vmem>>, vector<16x32xbf16>
    tpu.vector_store %arg4[%c0_9, %c0_10], %17 {strides = array<i32>} : memref<16x32xbf16, #tpu.memory_space<vmem>>, vector<16x32xbf16>,
    return
  }
  func.func @transform_0(%arg0: i32) -> (i32, i32) {
    %c0_i32 = arith.constant 0 : i32
    %c0_i32_0 = arith.constant 0 : i32
    return %arg0, %c0_i32 : i32, i32
  }
  func.func @transform_1(%arg0: i32) -> (i32, i32) {
    %c0_i32 = arith.constant 0 : i32
    %c0_i32_0 = arith.constant 0 : i32
    %c0_i32_1 = arith.constant 0 : i32
    return %c0_i32, %c0_i32_0 : i32, i32
  }
  func.func @transform_2(%arg0: i32) -> (i32, i32) {
    %c0_i32 = arith.constant 0 : i32
    %c0_i32_0 = arith.constant 0 : i32
    %c0_i32_1 = arith.constant 0 : i32
    return %c0_i32, %c0_i32_0 : i32, i32
  }
  func.func @transform_3(%arg0: i32) -> (i32, i32) {
    %c0_i32 = arith.constant 0 : i32
    %c0_i32_0 = arith.constant 0 : i32
    return %arg0, %c0_i32 : i32, i32
  }
}

module attributes {stable_mosaic.version = 11 : i64} {
  func.func @_conv_block_kernel(%arg0: i32, %arg1: memref<8x512xbf16, #tpu.memory_space<vmem>>, %arg2: memref<512x64xbf16, #tpu.memory_space<vmem>>, %arg3: memref<3x64xf32, #tpu.memory_space<vmem>>, %arg4: memref<8x64xbf16, #tpu.memory_space<vmem>>) attributes {dimension_semantics = [#tpu.dimension_semantics<parallel>], iteration_bounds = array<i64: 1>, scalar_prefetch = 0 : i64, scratch_operands = 0 : i64, tpu.core_type = #tpu.core_type<tc>, window_params = [{transform_indices = @transform_0, window_bounds = array<i64: 8, 512>}, {pipeline_mode = #tpu.pipeline_mode<synchronous>, transform_indices = @transform_1, window_bounds = array<i64: 512, 64>}, {pipeline_mode = #tpu.pipeline_mode<synchronous>, transform_indices = @transform_2, window_bounds = array<i64: 3, 64>}, {transform_indices = @transform_3, window_bounds = array<i64: 8, 64>}]} {
    %c0 = arith.constant 0 : index
    %c0_0 = arith.constant 0 : index
    %0 = vector.load %arg1[%c0, %c0_0] : memref<8x512xbf16, #tpu.memory_space<vmem>>, vector<8x512xbf16>
    %c0_1 = arith.constant 0 : index
    %c0_2 = arith.constant 0 : index
    %1 = vector.load %arg2[%c0_1, %c0_2] : memref<512x64xbf16, #tpu.memory_space<vmem>>, vector<512x64xbf16>
    %cst = arith.constant dense<0.000000e+00> : vector<8x64xf32>
    %2 = tpu.matmul %0, %1, %cst {dimension_numbers = #tpu.dot_dimension_numbers<[1], [0], [0], [1], [0, 0, 1, 1], [], []>} : vector<8x512xbf16>, vector<512x64xbf16>, vector<8x64xf32> -> vector<8x64xf32>
    %c0_3 = arith.constant 0 : index
    %c0_4 = arith.constant 0 : index
    %3 = vector.load %arg3[%c0_3, %c0_4] : memref<3x64xf32, #tpu.memory_space<vmem>>, vector<1x64xf32>
    %4 = vector.broadcast %3 : vector<1x64xf32> to vector<8x64xf32>
    %5 = arith.addf %2, %4 : vector<8x64xf32>
    %cst_5 = arith.constant 0.000000e+00 : f32
    %6 = vector.broadcast %cst_5 : f32 to vector<8x64xf32>
    %7 = arith.cmpf ogt, %5, %6 : vector<8x64xf32>
    %cst_6 = arith.constant 2.000000e-01 : f32
    %8 = vector.broadcast %cst_6 : f32 to vector<8x64xf32>
    %9 = arith.mulf %8, %5 : vector<8x64xf32>
    %10 = arith.select %7, %5, %9 : vector<8x64xi1>, vector<8x64xf32>
    %c1 = arith.constant 1 : index
    %c0_7 = arith.constant 0 : index
    %11 = vector.load %arg3[%c1, %c0_7] : memref<3x64xf32, #tpu.memory_space<vmem>>, vector<1x64xf32>
    %12 = vector.broadcast %11 : vector<1x64xf32> to vector<8x64xf32>
    %13 = arith.mulf %10, %12 : vector<8x64xf32>
    %c2 = arith.constant 2 : index
    %c0_8 = arith.constant 0 : index
    %14 = vector.load %arg3[%c2, %c0_8] : memref<3x64xf32, #tpu.memory_space<vmem>>, vector<1x64xf32>
    %15 = vector.broadcast %14 : vector<1x64xf32> to vector<8x64xf32>
    %16 = arith.addf %13, %15 : vector<8x64xf32>
    %17 = arith.truncf %16 : vector<8x64xf32> to vector<8x64xbf16>
    %c0_9 = arith.constant 0 : index
    %c0_10 = arith.constant 0 : index
    %18 = vector.load %arg4[%c0_9, %c0_10] : memref<8x64xbf16, #tpu.memory_space<vmem>>, vector<8x64xbf16>
    tpu.vector_store %arg4[%c0_9, %c0_10], %17 {strides = array<i32>} : memref<8x64xbf16, #tpu.memory_space<vmem>>, vector<8x64xbf16>,
    return
  }
  func.func @transform_0(%arg0: i32) -> (i32, i32) {
    %c0_i32 = arith.constant 0 : i32
    %c0_i32_0 = arith.constant 0 : i32
    return %arg0, %c0_i32 : i32, i32
  }
  func.func @transform_1(%arg0: i32) -> (i32, i32) {
    %c0_i32 = arith.constant 0 : i32
    %c0_i32_0 = arith.constant 0 : i32
    %c0_i32_1 = arith.constant 0 : i32
    return %c0_i32, %c0_i32_0 : i32, i32
  }
  func.func @transform_2(%arg0: i32) -> (i32, i32) {
    %c0_i32 = arith.constant 0 : i32
    %c0_i32_0 = arith.constant 0 : i32
    %c0_i32_1 = arith.constant 0 : i32
    return %c0_i32, %c0_i32_0 : i32, i32
  }
  func.func @transform_3(%arg0: i32) -> (i32, i32) {
    %c0_i32 = arith.constant 0 : i32
    %c0_i32_0 = arith.constant 0 : i32
    return %arg0, %c0_i32 : i32, i32
  }
}

module attributes {stable_mosaic.version = 11 : i64} {
  func.func @_conv_block_kernel(%arg0: i32, %arg1: memref<8x1024xbf16, #tpu.memory_space<vmem>>, %arg2: memref<1024x128xbf16, #tpu.memory_space<vmem>>, %arg3: memref<3x128xf32, #tpu.memory_space<vmem>>, %arg4: memref<8x128xbf16, #tpu.memory_space<vmem>>) attributes {dimension_semantics = [#tpu.dimension_semantics<parallel>], iteration_bounds = array<i64: 1>, scalar_prefetch = 0 : i64, scratch_operands = 0 : i64, tpu.core_type = #tpu.core_type<tc>, window_params = [{transform_indices = @transform_0, window_bounds = array<i64: 8, 1024>}, {pipeline_mode = #tpu.pipeline_mode<synchronous>, transform_indices = @transform_1, window_bounds = array<i64: 1024, 128>}, {pipeline_mode = #tpu.pipeline_mode<synchronous>, transform_indices = @transform_2, window_bounds = array<i64: 3, 128>}, {transform_indices = @transform_3, window_bounds = array<i64: 8, 128>}]} {
    %c0 = arith.constant 0 : index
    %c0_0 = arith.constant 0 : index
    %0 = vector.load %arg1[%c0, %c0_0] : memref<8x1024xbf16, #tpu.memory_space<vmem>>, vector<8x1024xbf16>
    %c0_1 = arith.constant 0 : index
    %c0_2 = arith.constant 0 : index
    %1 = vector.load %arg2[%c0_1, %c0_2] : memref<1024x128xbf16, #tpu.memory_space<vmem>>, vector<1024x128xbf16>
    %cst = arith.constant dense<0.000000e+00> : vector<8x128xf32>
    %2 = tpu.matmul %0, %1, %cst {dimension_numbers = #tpu.dot_dimension_numbers<[1], [0], [0], [1], [0, 0, 1, 1], [], []>} : vector<8x1024xbf16>, vector<1024x128xbf16>, vector<8x128xf32> -> vector<8x128xf32>
    %c0_3 = arith.constant 0 : index
    %c0_4 = arith.constant 0 : index
    %3 = vector.load %arg3[%c0_3, %c0_4] : memref<3x128xf32, #tpu.memory_space<vmem>>, vector<1x128xf32>
    %4 = vector.broadcast %3 : vector<1x128xf32> to vector<8x128xf32>
    %5 = arith.addf %2, %4 : vector<8x128xf32>
    %cst_5 = arith.constant 0.000000e+00 : f32
    %6 = vector.broadcast %cst_5 : f32 to vector<8x128xf32>
    %7 = arith.cmpf ogt, %5, %6 : vector<8x128xf32>
    %cst_6 = arith.constant 2.000000e-01 : f32
    %8 = vector.broadcast %cst_6 : f32 to vector<8x128xf32>
    %9 = arith.mulf %8, %5 : vector<8x128xf32>
    %10 = arith.select %7, %5, %9 : vector<8x128xi1>, vector<8x128xf32>
    %c1 = arith.constant 1 : index
    %c0_7 = arith.constant 0 : index
    %11 = vector.load %arg3[%c1, %c0_7] : memref<3x128xf32, #tpu.memory_space<vmem>>, vector<1x128xf32>
    %12 = vector.broadcast %11 : vector<1x128xf32> to vector<8x128xf32>
    %13 = arith.mulf %10, %12 : vector<8x128xf32>
    %c2 = arith.constant 2 : index
    %c0_8 = arith.constant 0 : index
    %14 = vector.load %arg3[%c2, %c0_8] : memref<3x128xf32, #tpu.memory_space<vmem>>, vector<1x128xf32>
    %15 = vector.broadcast %14 : vector<1x128xf32> to vector<8x128xf32>
    %16 = arith.addf %13, %15 : vector<8x128xf32>
    %17 = arith.truncf %16 : vector<8x128xf32> to vector<8x128xbf16>
    %c0_9 = arith.constant 0 : index
    %c0_10 = arith.constant 0 : index
    %18 = vector.load %arg4[%c0_9, %c0_10] : memref<8x128xbf16, #tpu.memory_space<vmem>>, vector<8x128xbf16>
    tpu.vector_store %arg4[%c0_9, %c0_10], %17 {strides = array<i32>} : memref<8x128xbf16, #tpu.memory_space<vmem>>, vector<8x128xbf16>,
    return
  }
  func.func @transform_0(%arg0: i32) -> (i32, i32) {
    %c0_i32 = arith.constant 0 : i32
    %c0_i32_0 = arith.constant 0 : i32
    return %arg0, %c0_i32 : i32, i32
  }
  func.func @transform_1(%arg0: i32) -> (i32, i32) {
    %c0_i32 = arith.constant 0 : i32
    %c0_i32_0 = arith.constant 0 : i32
    %c0_i32_1 = arith.constant 0 : i32
    return %c0_i32, %c0_i32_0 : i32, i32
  }
  func.func @transform_2(%arg0: i32) -> (i32, i32) {
    %c0_i32 = arith.constant 0 : i32
    %c0_i32_0 = arith.constant 0 : i32
    %c0_i32_1 = arith.constant 0 : i32
    return %c0_i32, %c0_i32_0 : i32, i32
  }
  func.func @transform_3(%arg0: i32) -> (i32, i32) {
    %c0_i32 = arith.constant 0 : i32
    %c0_i32_0 = arith.constant 0 : i32
    return %arg0, %c0_i32 : i32, i32
  }
}

module attributes {stable_mosaic.version = 11 : i64} {
  func.func @_head_kernel(%arg0: i32, %arg1: memref<8x128xbf16, #tpu.memory_space<vmem>>, %arg2: memref<1x128xf32, #tpu.memory_space<vmem>>, %arg3: memref<1x1xf32, #tpu.memory_space<vmem>>, %arg4: memref<8x1xf32, #tpu.memory_space<vmem>>) attributes {dimension_semantics = [#tpu.dimension_semantics<parallel>], iteration_bounds = array<i64: 1>, scalar_prefetch = 0 : i64, scratch_operands = 0 : i64, tpu.core_type = #tpu.core_type<tc>, window_params = [{transform_indices = @transform_0, window_bounds = array<i64: 8, 128>}, {pipeline_mode = #tpu.pipeline_mode<synchronous>, transform_indices = @transform_1, window_bounds = array<i64: 1, 128>}, {pipeline_mode = #tpu.pipeline_mode<synchronous>, transform_indices = @transform_2, window_bounds = array<i64: 1, 1>}, {transform_indices = @transform_3, window_bounds = array<i64: 8, 1>}]} {
    %c0 = arith.constant 0 : index
    %c0_0 = arith.constant 0 : index
    %0 = vector.load %arg1[%c0, %c0_0] : memref<8x128xbf16, #tpu.memory_space<vmem>>, vector<8x128xbf16>
    %1 = arith.extf %0 : vector<8x128xbf16> to vector<8x128xf32>
    %c0_1 = arith.constant 0 : index
    %c0_2 = arith.constant 0 : index
    %2 = vector.load %arg2[%c0_1, %c0_2] : memref<1x128xf32, #tpu.memory_space<vmem>>, vector<1x128xf32>
    %3 = vector.broadcast %2 : vector<1x128xf32> to vector<8x128xf32>
    %4 = arith.mulf %1, %3 : vector<8x128xf32>
    %cst = arith.constant dense<0.000000e+00> : vector<8xf32>
    %5 = vector.multi_reduction <add>, %4, %cst [1] : vector<8x128xf32> to vector<8xf32>
    %6 = vector.shape_cast %5 : vector<8xf32> to vector<8x1xf32>
    %c0_3 = arith.constant 0 : index
    %c0_4 = arith.constant 0 : index
    %7 = vector.load %arg3[%c0_3, %c0_4] : memref<1x1xf32, #tpu.memory_space<vmem>>, vector<1x1xf32>
    %8 = vector.broadcast %7 : vector<1x1xf32> to vector<8x1xf32>
    %9 = arith.addf %6, %8 : vector<8x1xf32>
    %10 = math.absf %9 : vector<8x1xf32>
    %cst_5 = arith.constant 0.000000e+00 : f32
    %11 = vector.broadcast %cst_5 : f32 to vector<8x1xf32>
    %12 = arith.subf %11, %10 : vector<8x1xf32>
    %13 = math.exp %12 : vector<8x1xf32>
    %cst_6 = arith.constant 0.000000e+00 : f32
    %14 = vector.broadcast %cst_6 : f32 to vector<8x1xf32>
    %15 = arith.cmpf oge, %9, %14 : vector<8x1xf32>
    %cst_7 = arith.constant 1.000000e+00 : f32
    %16 = vector.broadcast %cst_7 : f32 to vector<8x1xf32>
    %17 = arith.addf %16, %13 : vector<8x1xf32>
    %cst_8 = arith.constant 1.000000e+00 : f32
    %18 = vector.broadcast %cst_8 : f32 to vector<8x1xf32>
    %19 = arith.divf %18, %17 : vector<8x1xf32>
    %cst_9 = arith.constant 1.000000e+00 : f32
    %20 = vector.broadcast %cst_9 : f32 to vector<8x1xf32>
    %21 = arith.addf %20, %13 : vector<8x1xf32>
    %22 = arith.divf %13, %21 : vector<8x1xf32>
    %23 = arith.select %15, %19, %22 : vector<8x1xi1>, vector<8x1xf32>
    %c0_10 = arith.constant 0 : index
    %c0_11 = arith.constant 0 : index
    %24 = vector.load %arg4[%c0_10, %c0_11] : memref<8x1xf32, #tpu.memory_space<vmem>>, vector<8x1xf32>
    tpu.vector_store %arg4[%c0_10, %c0_11], %23 {strides = array<i32>} : memref<8x1xf32, #tpu.memory_space<vmem>>, vector<8x1xf32>,
    return
  }
  func.func @transform_0(%arg0: i32) -> (i32, i32) {
    %c0_i32 = arith.constant 0 : i32
    %c0_i32_0 = arith.constant 0 : i32
    return %arg0, %c0_i32 : i32, i32
  }
  func.func @transform_1(%arg0: i32) -> (i32, i32) {
    %c0_i32 = arith.constant 0 : i32
    %c0_i32_0 = arith.constant 0 : i32
    %c0_i32_1 = arith.constant 0 : i32
    return %c0_i32, %c0_i32_0 : i32, i32
  }
  func.func @transform_2(%arg0: i32) -> (i32, i32) {
    %c0_i32 = arith.constant 0 : i32
    %c0_i32_0 = arith.constant 0 : i32
    %c0_i32_1 = arith.constant 0 : i32
    return %c0_i32, %c0_i32_0 : i32, i32
  }
  func.func @transform_3(%arg0: i32) -> (i32, i32) {
    %c0_i32 = arith.constant 0 : i32
    %c0_i32_0 = arith.constant 0 : i32
    return %arg0, %c0_i32 : i32, i32
  }
}

</mosaic_0001>

<llo_original>
// kernel: discriminator_forward.5
$region0: #{discriminator_forward.5}
  #allocation0 [shape = 'u32[]', space=smem, size = 0x4, offset = 0x4, fixed_abs, tag = 'smem constant byte address 0x4 - core index']
  #allocation1 [shape = 'u32[72,128]{1,0:T(1,128)}', space=vmem, size = 0x9000, scoped, tag = 'internal scratch']
  %s0 = inlined_call_operand.vmem [shape: bf16[128,64], index: 0, kind: input, shape index: {}]
  %s1 = inlined_call_operand.vmem [shape: bf16[64,16], index: 1, kind: input, shape index: {}]
  %s2 = inlined_call_operand.vmem [shape: f32[3,16], index: 2, kind: input, shape index: {}]
  %s3 = inlined_call_operand.vmem [shape: bf16[128,16], index: 3, kind: output, shape index: {}]
  %s4 = sld [smem:[#allocation0]]
  $region45: #{discriminator_forward.5} parent=0
    _
  %s6 = ssub.s32 1, %s4
  %s7 = scalar_select 0, %s6, %s4
  loop: start=0, step=1, limit=4
  $region2: #{discriminator_forward.5} parent=0 // loop_pre_header
    _
  $region3: #{discriminator_forward.5} parent=0 // loop_header
    %s9 = sphi 0, %s13
    %p10 = scmp.ge.s32.totalorder %s9, 4
    %s19 = sphi 0, %s21
    %s22 = sphi 0, %s19
    %s23 = sphi 0, %s22
    %s39 = sphi 0, %s23
    %s43 = sphi 0, %s43
    %s45 = sphi 0, %s43
    %s46 = sphi 0, %s45
    %s60 = sphi 0, %s46
    %s64 = sphi 0, %s64
    %s66 = sphi 0, %s64
    %s67 = sphi 0, %s66
    %s81 = sphi 0, %s67
    %s87 = sphi 0, %s89
    %s90 = sphi 0, %s87
    %s91 = sphi 0, %s90
    %s107 = sphi 0, %s91
  $region4: #{discriminator_forward.5} parent=0 // loop_header_branch
    %12 = sbr.rel (%p10) target = $region8
  $region5: #{discriminator_forward.5} parent=0 // loop_body
    %s14 = ssub.s32 %s9, 1
    %s15 = ssub.s32 %s9, 2
    %s16 = sadd.s32 %s9, 1
    %s17 = ssub.s32 %s9, %s16
    %p18 = scmp.eq.s32.totalorder %s17, 0
    %s20 = sadd.s32 %s19, 1
    %s21 = scalar_select %p18, %s19, %s20
    %p24 = pneg %p18
    %p25 = scmp.eq.s32.totalorder %s9, 1
    %p26 = por %p24, %p25
    %p27 = scmp.ne.s32.totalorder %s19, %s22
    %p28 = scmp.eq.s32.totalorder %s9, 0
    %p29 = por %p27, %p28
    %p30 = scmp.ne.s32.totalorder %s19, %s22
    %p31 = scmp.eq.s32.totalorder %s14, 1
    %p32 = por %p30, %p31
    %p33 = scmp.ne.s32.totalorder %s22, %s23
    %p34 = scmp.eq.s32.totalorder %s14, 0
    %p35 = por %p33, %p34
    %p36 = scmp.ne.s32.totalorder %s22, %s23
    %p37 = scmp.eq.s32.totalorder %s15, 1
    %p38 = por %p36, %p37
    %p40 = scmp.ne.s32.totalorder %s23, %s39
    %p41 = scmp.eq.s32.totalorder %s15, 0
    %p42 = por %p40, %p41
    %s44 = sadd.s32 %s43, 1
    %p47 = scmp.eq.s32.totalorder %s9, 1
    %p48 = scmp.ne.s32.totalorder %s43, %s45
    %p49 = scmp.eq.s32.totalorder %s9, 0
    %p50 = por %p48, %p49
    %p51 = scmp.ne.s32.totalorder %s43, %s45
    %p52 = scmp.eq.s32.totalorder %s14, 1
    %p53 = por %p51, %p52
    %p54 = scmp.ne.s32.totalorder %s45, %s46
    %p55 = scmp.eq.s32.totalorder %s14, 0
    %p56 = por %p54, %p55
    %p57 = scmp.ne.s32.totalorder %s45, %s46
    %p58 = scmp.eq.s32.totalorder %s15, 1
    %p59 = por %p57, %p58
    %p61 = scmp.ne.s32.totalorder %s46, %s60
    %p62 = scmp.eq.s32.totalorder %s15, 0
    %p63 = por %p61, %p62
    %s65 = sadd.s32 %s64, 1
    %p68 = scmp.eq.s32.totalorder %s9, 1
    %p69 = scmp.ne.s32.totalorder %s64, %s66
    %p70 = scmp.eq.s32.totalorder %s9, 0
    %p71 = por %p69, %p70
    %p72 = scmp.ne.s32.totalorder %s64, %s66
    %p73 = scmp.eq.s32.totalorder %s14, 1
    %p74 = por %p72, %p73
    %p75 = scmp.ne.s32.totalorder %s66, %s67
    %p76 = scmp.eq.s32.totalorder %s14, 0
    %p77 = por %p75, %p76
    %p78 = scmp.ne.s32.totalorder %s66, %s67
    %p79 = scmp.eq.s32.totalorder %s15, 1
    %p80 = por %p78, %p79
    %p82 = scmp.ne.s32.totalorder %s67, %s81
    %p83 = scmp.eq.s32.totalorder %s15, 0
    %p84 = por %p82, %p83
    %s85 = ssub.s32 %s9, %s16
    %p86 = scmp.eq.s32.totalorder %s85, 0
    %s88 = sadd.s32 %s87, 1
    %s89 = scalar_select %p86, %s87, %s88
    %p92 = pneg %p86
    %p93 = scmp.eq.s32.totalorder %s9, 1
    %p94 = por %p92, %p93
    %p95 = scmp.ne.s32.totalorder %s87, %s90
    %p96 = scmp.eq.s32.totalorder %s9, 0
    %p97 = por %p95, %p96
    %p98 = scmp.ne.s32.totalorder %s87, %s90
    %p99 = scmp.eq.s32.totalorder %s14, 1
    %p100 = por %p98, %p99
    %p101 = scmp.ne.s32.totalorder %s90, %s91
    %p102 = scmp.eq.s32.totalorder %s14, 0
    %p103 = por %p101, %p102
    %p104 = scmp.ne.s32.totalorder %s90, %s91
    %p105 = scmp.eq.s32.totalorder %s15, 1
    %p106 = por %p104, %p105
    %p108 = scmp.ne.s32.totalorder %s91, %s107
    %p109 = scmp.eq.s32.totalorder %s15, 0
    %p110 = por %p108, %p109
    %p111 = scmp.le.s32.totalorder 1, %s9
    %p112 = scmp.lt.s32.totalorder %s9, 3
    %p113 = pnand %p111, %p112
    %p114 = pneg %p113
    // Predicated region
    $region9: #{discriminator_forward.5} parent=5 // pred_check
      _
    $region10: #{discriminator_forward.5} parent=5 // pred_check_branch
      %116 = sbr.rel (%p113) target = $region12
    $region11: #{discriminator_forward.5} parent=5 // pred_region
      %s117 = ssub.s32 %s9, 1
      // Predicated region
      $region13: #{discriminator_forward.5} parent=11 // pred_check
        %p118 = pneg %p56
      $region14: #{discriminator_forward.5} parent=11 // pred_check_branch
        %120 = sbr.rel (%p118) target = $region16
      $region15: #{discriminator_forward.5} parent=11 // pred_region
        _
      $region16: #{discriminator_forward.5} parent=11 // pred_fallthru
        _
      // Predicated region
      $region17: #{discriminator_forward.5} parent=11 // pred_check
        %p121 = pneg %p77
      $region18: #{discriminator_forward.5} parent=11 // pred_check_branch
        %123 = sbr.rel (%p121) target = $region20
      $region19: #{discriminator_forward.5} parent=11 // pred_region
        _
      $region20: #{discriminator_forward.5} parent=11 // pred_fallthru
        _
    $region12: #{discriminator_forward.5} parent=5 // pred_fallthru
      _
    %p124 = scmp.lt.s32.totalorder %s9, 2
    // Predicated region
    $region21: #{discriminator_forward.5} parent=5 // pred_check
      %p125 = pneg %p124
    $region22: #{discriminator_forward.5} parent=5 // pred_check_branch
      %127 = sbr.rel (%p125) target = $region24
    $region23: #{discriminator_forward.5} parent=5 // pred_region
      // Predicated region
      $region25: #{discriminator_forward.5} parent=23 // pred_check
        %p128 = pneg %p29
      $region26: #{discriminator_forward.5} parent=23 // pred_check_branch
        %130 = sbr.rel (%p128) target = $region28
      $region27: #{discriminator_forward.5} parent=23 // pred_region
        %s131 = smul.u32 8, %s9
        %p132 = scmp.lt.s32.totalorder %s131, 15
        %s133 = scalar_select %p132, %s131, 15
        %s134 = smul.addr %s133, 4
        %s135 = scalar_lea.vmem %s0, %s134
        %s136 = smul.u32 8, %s9
      $region28: #{discriminator_forward.5} parent=23 // pred_fallthru
        _
    $region24: #{discriminator_forward.5} parent=5 // pred_fallthru
      _
    %p137 = scmp.le.s32.totalorder 1, %s9
    %p138 = scmp.lt.s32.totalorder %s9, 3
    %p139 = pnand %p137, %p138
    %p140 = pneg %p139
    // Predicated region
    $region29: #{discriminator_forward.5} parent=5 // pred_check
      _
    $region30: #{discriminator_forward.5} parent=5 // pred_check_branch
      %142 = sbr.rel (%p139) target = $region32
    $region31: #{discriminator_forward.5} parent=5 // pred_region
      %s143 = ssub.s32 %s9, 1
      %s144 = smul.u32 8, %s14
      %p145 = scmp.lt.s32.totalorder %s144, 15
      %s146 = scalar_select %p145, %s144, 15
      %s147 = smul.addr %s146, 4
      %s148 = scalar_lea.vmem %s0, %s147
      %p149 = pneg %p35
      %p150 = pneg %p32
      %p151 = pneg %p56
      %p152 = pneg %p53
      %p153 = pneg %p77
      %p154 = pneg %p74
      %p155 = pneg %p103
      %p156 = pneg %p100
      %s157 = smul.u32 8, %s14
      %p158 = scmp.lt.s32.totalorder %s157, 15
      %s159 = scalar_select %p158, %s157, 15
      %s160 = smul.addr %s159, 4
      %s161 = scalar_lea.vmem %s3, %s160
      %s162 = smul.u32 8, %s14
      %p163 = scmp.lt.s32.totalorder %s162, 15
      %s164 = scalar_select %p163, %s162, 15
      %s165 = smul.addr %s164, 4
      %s166 = scalar_lea.vmem %s0, %s165
      %s167 = smul.u32 8, %s14
      %s168 = smul.u32 8, %s14
      %p169 = scmp.lt.s32.totalorder %s168, 15
      %s170 = scalar_select %p169, %s168, 15
      %s171 = smul.addr %s170, 4
      %s172 = scalar_lea.vmem %s3, %s171
      %s173 = smul.u32 8, %s14
      %v175 = vld [vmem:[%s166] sm:$0xf]
      %v176 = vld [vmem:[%s166 + $0x4] sm:$0xf]
      %v177 = vld [vmem:[%s166 + $0x8] sm:$0xf]
      %v178 = vld [vmem:[%s166 + $0xc] sm:$0xf]
      %v179 = vld [vmem:[%s166 + $0x10] sm:$0xf]
      %v180 = vld [vmem:[%s166 + $0x14] sm:$0xf]
      %v181 = vld [vmem:[%s166 + $0x18] sm:$0xf]
      %v182 = vld [vmem:[%s166 + $0x1c] sm:$0xf]
      %v183 = vld [vmem:[%s1] sm:$0xf]
      %v184 = vld [vmem:[%s1 + $0x4] sm:$0xf]
      %v185 = vld [vmem:[%s1 + $0x8] sm:$0xf]
      %v186 = vld [vmem:[%s1 + $0xc] sm:$0xf]
      %v187 = vld [vmem:[%s1 + $0x10] sm:$0xf]
      %v188 = vld [vmem:[%s1 + $0x14] sm:$0xf]
      %v189 = vld [vmem:[%s1 + $0x18] sm:$0xf]
      %v190 = vld [vmem:[%s1 + $0x1c] sm:$0xf]
      %v191 = vld [vmem:[%s2] sm:$0x1]
      %v192 = vperm.slane %v191, 0
      %v201 = vunpack.c.l.b16 %v175
      %v202 = vunpack.c.l.b16 %v176
      %v203 = vunpack.c.l.b16 %v177
      %v204 = vunpack.c.l.b16 %v178
      %v205 = vunpack.c.l.b16 %v179
      %v206 = vunpack.c.l.b16 %v180
      %v207 = vunpack.c.l.b16 %v181
      %v208 = vunpack.c.l.b16 %v182
      %v209 = vpack.c.b16 %v202, %v201
      %v210 = vpack.c.b16 %v204, %v203
      %v211 = vpack.c.b16 %v206, %v205
      %v212 = vpack.c.b16 %v208, %v207
      %v221 = vunpack.c.l.b16 %v183
      %v222 = vunpack.c.l.b16 %v184
      %v223 = vunpack.c.l.b16 %v185
      %v224 = vunpack.c.l.b16 %v186
      %v225 = vunpack.c.l.b16 %v187
      %v226 = vunpack.c.l.b16 %v188
      %v227 = vunpack.c.l.b16 %v189
      %v228 = vunpack.c.l.b16 %v190
      %v229 = vpack.c.b16 %v222, %v221
      %v230 = vpack.c.b16 %v224, %v223
      %v231 = vpack.c.b16 %v226, %v225
      %v232 = vpack.c.b16 %v228, %v227
      %vm237 = vcmask 523264
      %v239 = vsel %vm237, %v209, 0
      %v242 = vsel %vm237, %v210, 0
      %v245 = vsel %vm237, %v211, 0
      %v248 = vsel %vm237, %v212, 0
      %250 = vmatpush.bf16.msra.mxu0 0
      %251 = vmatpush.bf16.msra.mxu0 0
      %252 = vmatpush.bf16.msra.mxu0 0
      %253 = vmatpush.bf16.msra.mxu0 0
      %254 = vmatpush.bf16.msra.mxu0 %v232
      %255 = vmatpush.bf16.msra.mxu0 %v231
      %256 = vmatpush.bf16.msra.mxu0 %v230
      %257 = vmatpush.bf16.msra.mxu0 %v229
      %258 = vmatmul.bf16.gmra.mxu0 %v239
      %v259 = vpop.f32.mrf.mxu0
      %v260 = vadd.f32 %v192, %v259
      %v261 = vpop.f32.mrf.mxu0
      %v262 = vadd.f32 %v192, %v261
      %263 = vmatmul.bf16.gmra.mxu0 %v242
      %v264 = vpop.f32.mrf.mxu0
      %v265 = vadd.f32 %v192, %v264
      %v266 = vpop.f32.mrf.mxu0
      %v267 = vadd.f32 %v192, %v266
      %268 = vmatmul.bf16.gmra.mxu0 %v245
      %v269 = vpop.f32.mrf.mxu0
      %v270 = vadd.f32 %v192, %v269
      %v271 = vpop.f32.mrf.mxu0
      %v272 = vadd.f32 %v192, %v271
      %273 = vmatmul.bf16.gmra.mxu0 %v248
      %v274 = vpop.f32.mrf.mxu0
      %v275 = vadd.f32 %v192, %v274
      %v276 = vpop.f32.mrf.mxu0
      %v277 = vadd.f32 %v192, %v276
      %278 = vdwg.mxu0
      %vm279 = vcmp.gt.f32.partialorder %v260, 0.0
      %vm280 = vcmp.gt.f32.partialorder %v262, 0.0
      %vm281 = vcmp.gt.f32.partialorder %v265, 0.0
      %vm282 = vcmp.gt.f32.partialorder %v267, 0.0
      %vm283 = vcmp.gt.f32.partialorder %v270, 0.0
      %vm284 = vcmp.gt.f32.partialorder %v272, 0.0
      %vm285 = vcmp.gt.f32.partialorder %v275, 0.0
      %vm286 = vcmp.gt.f32.partialorder %v277, 0.0
      %v287 = vmul.f32 %v260, 0.2
      %v288 = vmul.f32 %v262, 0.2
      %v289 = vmul.f32 %v265, 0.2
      %v290 = vmul.f32 %v267, 0.2
      %v291 = vmul.f32 %v270, 0.2
      %v292 = vmul.f32 %v272, 0.2
      %v293 = vmul.f32 %v275, 0.2
      %v294 = vmul.f32 %v277, 0.2
      %v295 = vsel %vm279, %v260, %v287
      %v296 = vsel %vm280, %v262, %v288
      %v297 = vsel %vm281, %v265, %v289
      %v298 = vsel %vm282, %v267, %v290
      %v299 = vsel %vm283, %v270, %v291
      %v300 = vsel %vm284, %v272, %v292
      %v301 = vsel %vm285, %v275, %v293
      %v302 = vsel %vm286, %v277, %v294
      %v303 = vld [vmem:[%s2 + $0x1] sm:$0x1]
      %v304 = vperm.slane %v303, 0
      %v305 = vmul.f32 %v295, %v304
      %v306 = vmul.f32 %v296, %v304
      %v307 = vmul.f32 %v297, %v304
      %v308 = vmul.f32 %v298, %v304
      %v309 = vmul.f32 %v299, %v304
      %v310 = vmul.f32 %v300, %v304
      %v311 = vmul.f32 %v301, %v304
      %v312 = vmul.f32 %v302, %v304
      %v313 = vld [vmem:[%s2 + $0x2] sm:$0x1]
      %v314 = vperm.slane %v313, 0
      %v315 = vadd.f32 %v305, %v314
      %v316 = vadd.f32 %v306, %v314
      %v317 = vadd.f32 %v307, %v314
      %v318 = vadd.f32 %v308, %v314
      %v319 = vadd.f32 %v309, %v314
      %v320 = vadd.f32 %v310, %v314
      %v321 = vadd.f32 %v311, %v314
      %v322 = vadd.f32 %v312, %v314
      %v323 = vpack.c.bf16 %v315, %v315
      %v324 = vpack.c.bf16 %v316, %v316
      %v325 = vpack.c.bf16 %v317, %v317
      %v326 = vpack.c.bf16 %v318, %v318
      %v327 = vpack.c.bf16 %v319, %v319
      %v328 = vpack.c.bf16 %v320, %v320
      %v329 = vpack.c.bf16 %v321, %v321
      %v330 = vpack.c.bf16 %v322, %v322
      %vm331 = vcmask 125952
      %332 = vst.msk [vmem:[%s172] sm:$0xf] %vm331, %v323
      %333 = vst.msk [vmem:[%s172 + $0x4] sm:$0xf] %vm331, %v324
      %334 = vst.msk [vmem:[%s172 + $0x8] sm:$0xf] %vm331, %v325
      %335 = vst.msk [vmem:[%s172 + $0xc] sm:$0xf] %vm331, %v326
      %336 = vst.msk [vmem:[%s172 + $0x10] sm:$0xf] %vm331, %v327
      %337 = vst.msk [vmem:[%s172 + $0x14] sm:$0xf] %vm331, %v328
      %338 = vst.msk [vmem:[%s172 + $0x18] sm:$0xf] %vm331, %v329
      %339 = vst.msk [vmem:[%s172 + $0x1c] sm:$0xf] %vm331, %v330
      %s340 = smul.u32 8, %s14
      %p341 = scmp.lt.s32.totalorder %s340, 15
      %s342 = scalar_select %p341, %s340, 15
      %s343 = smul.addr %s342, 4
      %s344 = scalar_lea.vmem %s3, %s343
      // Predicated region
      $region33: #{discriminator_forward.5} parent=31 // pred_check
        %p345 = pneg %p100
      $region34: #{discriminator_forward.5} parent=31 // pred_check_branch
        %347 = sbr.rel (%p345) target = $region36
      $region35: #{discriminator_forward.5} parent=31 // pred_region
        %s348 = smul.u32 8, %s14
      $region36: #{discriminator_forward.5} parent=31 // pred_fallthru
        _
    $region32: #{discriminator_forward.5} parent=5 // pred_fallthru
      _
    %p349 = scmp.le.s32.totalorder 2, %s9
    // Predicated region
    $region37: #{discriminator_forward.5} parent=5 // pred_check
      %p350 = pneg %p349
    $region38: #{discriminator_forward.5} parent=5 // pred_check_branch
      %352 = sbr.rel (%p350) target = $region40
    $region39: #{discriminator_forward.5} parent=5 // pred_region
      %s353 = ssub.s32 %s9, 2
      // Predicated region
      $region41: #{discriminator_forward.5} parent=39 // pred_check
        %p354 = pneg %p106
      $region42: #{discriminator_forward.5} parent=39 // pred_check_branch
        %356 = sbr.rel (%p354) target = $region44
      $region43: #{discriminator_forward.5} parent=39 // pred_region
        %s357 = smul.u32 8, %s15
        %p358 = scmp.lt.s32.totalorder %s357, 15
        %s359 = scalar_select %p358, %s357, 15
        %s360 = smul.addr %s359, 4
        %s361 = scalar_lea.vmem %s3, %s360
      $region44: #{discriminator_forward.5} parent=39 // pred_fallthru
        _
    $region40: #{discriminator_forward.5} parent=5 // pred_fallthru
      _
  $region6: #{discriminator_forward.5} parent=0 // loop_footer
    %s13 = sadd.s32 1, %s9
  $region7: #{discriminator_forward.5} parent=0 // loop_footer_branch
    %8 = sbr.rel target = $region3
  $region8: #{discriminator_forward.5} parent=0 // loop_exit
    _

// kernel: discriminator_forward.6
$region0: #{discriminator_forward.6}
  #allocation0 [shape = 'u32[]', space=smem, size = 0x4, offset = 0x4, fixed_abs, tag = 'smem constant byte address 0x4 - core index']
  #allocation1 [shape = 'u32[72,128]{1,0:T(1,128)}', space=vmem, size = 0x9000, scoped, tag = 'internal scratch']
  %s0 = inlined_call_operand.vmem [shape: bf16[32,256], index: 0, kind: input, shape index: {}]
  %s1 = inlined_call_operand.vmem [shape: bf16[256,32], index: 1, kind: input, shape index: {}]
  %s2 = inlined_call_operand.vmem [shape: f32[3,32], index: 2, kind: input, shape index: {}]
  %s3 = inlined_call_operand.vmem [shape: bf16[32,32], index: 3, kind: output, shape index: {}]
  %s4 = sld [smem:[#allocation0]]
  $region45: #{discriminator_forward.6} parent=0
    _
  %s6 = ssub.s32 1, %s4
  %s7 = scalar_select 0, %s6, %s4
  loop: start=0, step=1, limit=4
  $region2: #{discriminator_forward.6} parent=0 // loop_pre_header
    _
  $region3: #{discriminator_forward.6} parent=0 // loop_header
    %s9 = sphi 0, %s13
    %p10 = scmp.ge.s32.totalorder %s9, 4
    %s19 = sphi 0, %s21
    %s22 = sphi 0, %s19
    %s23 = sphi 0, %s22
    %s39 = sphi 0, %s23
    %s43 = sphi 0, %s43
    %s45 = sphi 0, %s43
    %s46 = sphi 0, %s45
    %s60 = sphi 0, %s46
    %s64 = sphi 0, %s64
    %s66 = sphi 0, %s64
    %s67 = sphi 0, %s66
    %s81 = sphi 0, %s67
    %s87 = sphi 0, %s89
    %s90 = sphi 0, %s87
    %s91 = sphi 0, %s90
    %s107 = sphi 0, %s91
  $region4: #{discriminator_forward.6} parent=0 // loop_header_branch
    %12 = sbr.rel (%p10) target = $region8
  $region5: #{discriminator_forward.6} parent=0 // loop_body
    %s14 = ssub.s32 %s9, 1
    %s15 = ssub.s32 %s9, 2
    %s16 = sadd.s32 %s9, 1
    %s17 = ssub.s32 %s9, %s16
    %p18 = scmp.eq.s32.totalorder %s17, 0
    %s20 = sadd.s32 %s19, 1
    %s21 = scalar_select %p18, %s19, %s20
    %p24 = pneg %p18
    %p25 = scmp.eq.s32.totalorder %s9, 1
    %p26 = por %p24, %p25
    %p27 = scmp.ne.s32.totalorder %s19, %s22
    %p28 = scmp.eq.s32.totalorder %s9, 0
    %p29 = por %p27, %p28
    %p30 = scmp.ne.s32.totalorder %s19, %s22
    %p31 = scmp.eq.s32.totalorder %s14, 1
    %p32 = por %p30, %p31
    %p33 = scmp.ne.s32.totalorder %s22, %s23
    %p34 = scmp.eq.s32.totalorder %s14, 0
    %p35 = por %p33, %p34
    %p36 = scmp.ne.s32.totalorder %s22, %s23
    %p37 = scmp.eq.s32.totalorder %s15, 1
    %p38 = por %p36, %p37
    %p40 = scmp.ne.s32.totalorder %s23, %s39
    %p41 = scmp.eq.s32.totalorder %s15, 0
    %p42 = por %p40, %p41
    %s44 = sadd.s32 %s43, 1
    %p47 = scmp.eq.s32.totalorder %s9, 1
    %p48 = scmp.ne.s32.totalorder %s43, %s45
    %p49 = scmp.eq.s32.totalorder %s9, 0
    %p50 = por %p48, %p49
    %p51 = scmp.ne.s32.totalorder %s43, %s45
    %p52 = scmp.eq.s32.totalorder %s14, 1
    %p53 = por %p51, %p52
    %p54 = scmp.ne.s32.totalorder %s45, %s46
    %p55 = scmp.eq.s32.totalorder %s14, 0
    %p56 = por %p54, %p55
    %p57 = scmp.ne.s32.totalorder %s45, %s46
    %p58 = scmp.eq.s32.totalorder %s15, 1
    %p59 = por %p57, %p58
    %p61 = scmp.ne.s32.totalorder %s46, %s60
    %p62 = scmp.eq.s32.totalorder %s15, 0
    %p63 = por %p61, %p62
    %s65 = sadd.s32 %s64, 1
    %p68 = scmp.eq.s32.totalorder %s9, 1
    %p69 = scmp.ne.s32.totalorder %s64, %s66
    %p70 = scmp.eq.s32.totalorder %s9, 0
    %p71 = por %p69, %p70
    %p72 = scmp.ne.s32.totalorder %s64, %s66
    %p73 = scmp.eq.s32.totalorder %s14, 1
    %p74 = por %p72, %p73
    %p75 = scmp.ne.s32.totalorder %s66, %s67
    %p76 = scmp.eq.s32.totalorder %s14, 0
    %p77 = por %p75, %p76
    %p78 = scmp.ne.s32.totalorder %s66, %s67
    %p79 = scmp.eq.s32.totalorder %s15, 1
    %p80 = por %p78, %p79
    %p82 = scmp.ne.s32.totalorder %s67, %s81
    %p83 = scmp.eq.s32.totalorder %s15, 0
    %p84 = por %p82, %p83
    %s85 = ssub.s32 %s9, %s16
    %p86 = scmp.eq.s32.totalorder %s85, 0
    %s88 = sadd.s32 %s87, 1
    %s89 = scalar_select %p86, %s87, %s88
    %p92 = pneg %p86
    %p93 = scmp.eq.s32.totalorder %s9, 1
    %p94 = por %p92, %p93
    %p95 = scmp.ne.s32.totalorder %s87, %s90
    %p96 = scmp.eq.s32.totalorder %s9, 0
    %p97 = por %p95, %p96
    %p98 = scmp.ne.s32.totalorder %s87, %s90
    %p99 = scmp.eq.s32.totalorder %s14, 1
    %p100 = por %p98, %p99
    %p101 = scmp.ne.s32.totalorder %s90, %s91
    %p102 = scmp.eq.s32.totalorder %s14, 0
    %p103 = por %p101, %p102
    %p104 = scmp.ne.s32.totalorder %s90, %s91
    %p105 = scmp.eq.s32.totalorder %s15, 1
    %p106 = por %p104, %p105
    %p108 = scmp.ne.s32.totalorder %s91, %s107
    %p109 = scmp.eq.s32.totalorder %s15, 0
    %p110 = por %p108, %p109
    %p111 = scmp.le.s32.totalorder 1, %s9
    %p112 = scmp.lt.s32.totalorder %s9, 3
    %p113 = pnand %p111, %p112
    %p114 = pneg %p113
    // Predicated region
    $region9: #{discriminator_forward.6} parent=5 // pred_check
      _
    $region10: #{discriminator_forward.6} parent=5 // pred_check_branch
      %116 = sbr.rel (%p113) target = $region12
    $region11: #{discriminator_forward.6} parent=5 // pred_region
      %s117 = ssub.s32 %s9, 1
      // Predicated region
      $region13: #{discriminator_forward.6} parent=11 // pred_check
        %p118 = pneg %p56
      $region14: #{discriminator_forward.6} parent=11 // pred_check_branch
        %120 = sbr.rel (%p118) target = $region16
      $region15: #{discriminator_forward.6} parent=11 // pred_region
        _
      $region16: #{discriminator_forward.6} parent=11 // pred_fallthru
        _
      // Predicated region
      $region17: #{discriminator_forward.6} parent=11 // pred_check
        %p121 = pneg %p77
      $region18: #{discriminator_forward.6} parent=11 // pred_check_branch
        %123 = sbr.rel (%p121) target = $region20
      $region19: #{discriminator_forward.6} parent=11 // pred_region
        _
      $region20: #{discriminator_forward.6} parent=11 // pred_fallthru
        _
    $region12: #{discriminator_forward.6} parent=5 // pred_fallthru
      _
    %p124 = scmp.lt.s32.totalorder %s9, 2
    // Predicated region
    $region21: #{discriminator_forward.6} parent=5 // pred_check
      %p125 = pneg %p124
    $region22: #{discriminator_forward.6} parent=5 // pred_check_branch
      %127 = sbr.rel (%p125) target = $region24
    $region23: #{discriminator_forward.6} parent=5 // pred_region
      // Predicated region
      $region25: #{discriminator_forward.6} parent=23 // pred_check
        %p128 = pneg %p29
      $region26: #{discriminator_forward.6} parent=23 // pred_check_branch
        %130 = sbr.rel (%p128) target = $region28
      $region27: #{discriminator_forward.6} parent=23 // pred_region
        %s131 = smul.u32 2, %s9
        %p132 = scmp.lt.s32.totalorder %s131, 3
        %s133 = scalar_select %p132, %s131, 3
        %s134 = smul.addr %s133, 2
        %s135 = smul.addr %s134, 4
        %s136 = scalar_lea.vmem %s0, %s135
        %s137 = smul.u32 2, %s9
      $region28: #{discriminator_forward.6} parent=23 // pred_fallthru
        _
    $region24: #{discriminator_forward.6} parent=5 // pred_fallthru
      _
    %p138 = scmp.le.s32.totalorder 1, %s9
    %p139 = scmp.lt.s32.totalorder %s9, 3
    %p140 = pnand %p138, %p139
    %p141 = pneg %p140
    // Predicated region
    $region29: #{discriminator_forward.6} parent=5 // pred_check
      _
    $region30: #{discriminator_forward.6} parent=5 // pred_check_branch
      %143 = sbr.rel (%p140) target = $region32
    $region31: #{discriminator_forward.6} parent=5 // pred_region
      %s144 = ssub.s32 %s9, 1
      %s145 = smul.u32 2, %s14
      %p146 = scmp.lt.s32.totalorder %s145, 3
      %s147 = scalar_select %p146, %s145, 3
      %s148 = smul.addr %s147, 2
      %s149 = smul.addr %s148, 4
      %s150 = scalar_lea.vmem %s0, %s149
      %p151 = pneg %p35
      %p152 = pneg %p32
      %p153 = pneg %p56
      %p154 = pneg %p53
      %p155 = pneg %p77
      %p156 = pneg %p74
      %p157 = pneg %p103
      %p158 = pneg %p100
      %s159 = smul.u32 2, %s14
      %p160 = scmp.lt.s32.totalorder %s159, 3
      %s161 = scalar_select %p160, %s159, 3
      %s162 = smul.addr %s161, 4
      %s163 = scalar_lea.vmem %s3, %s162
      %s164 = smul.u32 2, %s14
      %p165 = scmp.lt.s32.totalorder %s164, 3
      %s166 = scalar_select %p165, %s164, 3
      %s167 = smul.addr %s166, 2
      %s168 = smul.addr %s167, 4
      %s169 = scalar_lea.vmem %s0, %s168
      %s170 = smul.u32 2, %s14
      %s171 = smul.u32 2, %s14
      %p172 = scmp.lt.s32.totalorder %s171, 3
      %s173 = scalar_select %p172, %s171, 3
      %s174 = smul.addr %s173, 4
      %s175 = scalar_lea.vmem %s3, %s174
      %s176 = smul.u32 2, %s14
      %v177 = vld [vmem:[%s169] sm:$0xff]
      %v178 = vld [vmem:[%s169 + $0x8] sm:$0xff]
      %v179 = vld [vmem:[%s1] sm:$0xf]
      %v180 = vld [vmem:[%s1 + $0x4] sm:$0xf]
      %v181 = vld [vmem:[%s1 + $0x8] sm:$0xf]
      %v182 = vld [vmem:[%s1 + $0xc] sm:$0xf]
      %v183 = vld [vmem:[%s1 + $0x10] sm:$0xf]
      %v184 = vld [vmem:[%s1 + $0x14] sm:$0xf]
      %v185 = vld [vmem:[%s1 + $0x18] sm:$0xf]
      %v186 = vld [vmem:[%s1 + $0x1c] sm:$0xf]
      %v187 = vld [vmem:[%s1 + $0x20] sm:$0xf]
      %v188 = vld [vmem:[%s1 + $0x24] sm:$0xf]
      %v189 = vld [vmem:[%s1 + $0x28] sm:$0xf]
      %v190 = vld [vmem:[%s1 + $0x2c] sm:$0xf]
      %v191 = vld [vmem:[%s1 + $0x30] sm:$0xf]
      %v192 = vld [vmem:[%s1 + $0x34] sm:$0xf]
      %v193 = vld [vmem:[%s1 + $0x38] sm:$0xf]
      %v194 = vld [vmem:[%s1 + $0x3c] sm:$0xf]
      %v195 = vld [vmem:[%s1 + $0x40] sm:$0xf]
      %v196 = vld [vmem:[%s1 + $0x44] sm:$0xf]
      %v197 = vld [vmem:[%s1 + $0x48] sm:$0xf]
      %v198 = vld [vmem:[%s1 + $0x4c] sm:$0xf]
      %v199 = vld [vmem:[%s1 + $0x50] sm:$0xf]
      %v200 = vld [vmem:[%s1 + $0x54] sm:$0xf]
      %v201 = vld [vmem:[%s1 + $0x58] sm:$0xf]
      %v202 = vld [vmem:[%s1 + $0x5c] sm:$0xf]
      %v203 = vld [vmem:[%s1 + $0x60] sm:$0xf]
      %v204 = vld [vmem:[%s1 + $0x64] sm:$0xf]
      %v205 = vld [vmem:[%s1 + $0x68] sm:$0xf]
      %v206 = vld [vmem:[%s1 + $0x6c] sm:$0xf]
      %v207 = vld [vmem:[%s1 + $0x70] sm:$0xf]
      %v208 = vld [vmem:[%s1 + $0x74] sm:$0xf]
      %v209 = vld [vmem:[%s1 + $0x78] sm:$0xf]
      %v210 = vld [vmem:[%s1 + $0x7c] sm:$0xf]
      %v211 = vld [vmem:[%s2] sm:$0x1]
      %v212 = vperm.slane %v211, 0
      %v215 = vunpack.c.l.b16 %v177
      %v216 = vunpack.c.h.b16 %v177
      %v217 = vunpack.c.l.b16 %v178
      %v218 = vunpack.c.h.b16 %v178
      %v219 = vpack.c.b16 %v217, %v215
      %v220 = vpack.c.b16 %v218, %v216
      %v255 = vunpack.c.l.b16 %v179
      %v256 = vunpack.c.l.b16 %v180
      %v257 = vunpack.c.l.b16 %v181
      %v258 = vunpack.c.l.b16 %v182
      %v259 = vunpack.c.l.b16 %v183
      %v260 = vunpack.c.l.b16 %v184
      %v261 = vunpack.c.l.b16 %v185
      %v262 = vunpack.c.l.b16 %v186
      %v263 = vunpack.c.l.b16 %v187
      %v264 = vunpack.c.l.b16 %v188
      %v265 = vunpack.c.l.b16 %v189
      %v266 = vunpack.c.l.b16 %v190
      %v267 = vunpack.c.l.b16 %v191
      %v268 = vunpack.c.l.b16 %v192
      %v269 = vunpack.c.l.b16 %v193
      %v270 = vunpack.c.l.b16 %v194
      %v271 = vunpack.c.l.b16 %v195
      %v272 = vunpack.c.l.b16 %v196
      %v273 = vunpack.c.l.b16 %v197
      %v274 = vunpack.c.l.b16 %v198
      %v275 = vunpack.c.l.b16 %v199
      %v276 = vunpack.c.l.b16 %v200
      %v277 = vunpack.c.l.b16 %v201
      %v278 = vunpack.c.l.b16 %v202
      %v279 = vunpack.c.l.b16 %v203
      %v280 = vunpack.c.l.b16 %v204
      %v281 = vunpack.c.l.b16 %v205
      %v282 = vunpack.c.l.b16 %v206
      %v283 = vunpack.c.l.b16 %v207
      %v284 = vunpack.c.l.b16 %v208
      %v285 = vunpack.c.l.b16 %v209
      %v286 = vunpack.c.l.b16 %v210
      %v287 = vpack.c.b16 %v256, %v255
      %v288 = vpack.c.b16 %v258, %v257
      %v289 = vpack.c.b16 %v260, %v259
      %v290 = vpack.c.b16 %v262, %v261
      %v291 = vpack.c.b16 %v264, %v263
      %v292 = vpack.c.b16 %v266, %v265
      %v293 = vpack.c.b16 %v268, %v267
      %v294 = vpack.c.b16 %v270, %v269
      %v295 = vpack.c.b16 %v272, %v271
      %v296 = vpack.c.b16 %v274, %v273
      %v297 = vpack.c.b16 %v276, %v275
      %v298 = vpack.c.b16 %v278, %v277
      %v299 = vpack.c.b16 %v280, %v279
      %v300 = vpack.c.b16 %v282, %v281
      %v301 = vpack.c.b16 %v284, %v283
      %v302 = vpack.c.b16 %v286, %v285
      %319 = vmatpush.bf16.msra.mxu0 %v294
      %320 = vmatpush.bf16.msra.mxu0 %v293
      %321 = vmatpush.bf16.msra.mxu0 %v292
      %322 = vmatpush.bf16.msra.mxu0 %v291
      %323 = vmatpush.bf16.msra.mxu0 %v290
      %324 = vmatpush.bf16.msra.mxu0 %v289
      %325 = vmatpush.bf16.msra.mxu0 %v288
      %326 = vmatpush.bf16.msra.mxu0 %v287
      %327 = vmatmul.bf16.gmra.mxu0 %v219
      %v328 = vpop.f32.mrf.mxu0
      %v329 = vadd.f32 %v212, %v328
      %v330 = vpop.f32.mrf.mxu0
      %v331 = vadd.f32 %v212, %v330
      %332 = vdwg.mxu0
      %333 = vmatpush.bf16.msra.mxu0 %v302
      %334 = vmatpush.bf16.msra.mxu0 %v301
      %335 = vmatpush.bf16.msra.mxu0 %v300
      %336 = vmatpush.bf16.msra.mxu0 %v299
      %337 = vmatpush.bf16.msra.mxu0 %v298
      %338 = vmatpush.bf16.msra.mxu0 %v297
      %339 = vmatpush.bf16.msra.mxu0 %v296
      %340 = vmatpush.bf16.msra.mxu0 %v295
      %341 = vmatmul.bf16.gmra.mxu0 %v220
      %v342 = vpop.f32.mrf.mxu0
      %v343 = vadd.f32 %v329, %v342
      %v344 = vpop.f32.mrf.mxu0
      %v345 = vadd.f32 %v331, %v344
      %346 = vdwg.mxu0
      %vm347 = vcmp.gt.f32.partialorder %v343, 0.0
      %vm348 = vcmp.gt.f32.partialorder %v345, 0.0
      %v349 = vmul.f32 %v343, 0.2
      %v350 = vmul.f32 %v345, 0.2
      %v351 = vsel %vm347, %v343, %v349
      %v352 = vsel %vm348, %v345, %v350
      %v353 = vld [vmem:[%s2 + $0x1] sm:$0x1]
      %v354 = vperm.slane %v353, 0
      %v355 = vmul.f32 %v351, %v354
      %v356 = vmul.f32 %v352, %v354
      %v357 = vld [vmem:[%s2 + $0x2] sm:$0x1]
      %v358 = vperm.slane %v357, 0
      %v359 = vadd.f32 %v355, %v358
      %v360 = vadd.f32 %v356, %v358
      %v361 = vpack.c.bf16 %v359, %v359
      %v362 = vpack.c.bf16 %v360, %v360
      %vm363 = vcmask 257024
      %364 = vst.msk [vmem:[%s175] sm:$0xf] %vm363, %v361
      %365 = vst.msk [vmem:[%s175 + $0x4] sm:$0xf] %vm363, %v362
      %s366 = smul.u32 2, %s14
      %p367 = scmp.lt.s32.totalorder %s366, 3
      %s368 = scalar_select %p367, %s366, 3
      %s369 = smul.addr %s368, 4
      %s370 = scalar_lea.vmem %s3, %s369
      // Predicated region
      $region33: #{discriminator_forward.6} parent=31 // pred_check
        %p371 = pneg %p100
      $region34: #{discriminator_forward.6} parent=31 // pred_check_branch
        %373 = sbr.rel (%p371) target = $region36
      $region35: #{discriminator_forward.6} parent=31 // pred_region
        %s374 = smul.u32 2, %s14
      $region36: #{discriminator_forward.6} parent=31 // pred_fallthru
        _
    $region32: #{discriminator_forward.6} parent=5 // pred_fallthru
      _
    %p375 = scmp.le.s32.totalorder 2, %s9
    // Predicated region
    $region37: #{discriminator_forward.6} parent=5 // pred_check
      %p376 = pneg %p375
    $region38: #{discriminator_forward.6} parent=5 // pred_check_branch
      %378 = sbr.rel (%p376) target = $region40
    $region39: #{discriminator_forward.6} parent=5 // pred_region
      %s379 = ssub.s32 %s9, 2
      // Predicated region
      $region41: #{discriminator_forward.6} parent=39 // pred_check
        %p380 = pneg %p106
      $region42: #{discriminator_forward.6} parent=39 // pred_check_branch
        %382 = sbr.rel (%p380) target = $region44
      $region43: #{discriminator_forward.6} parent=39 // pred_region
        %s383 = smul.u32 2, %s15
        %p384 = scmp.lt.s32.totalorder %s383, 3
        %s385 = scalar_select %p384, %s383, 3
        %s386 = smul.addr %s385, 4
        %s387 = scalar_lea.vmem %s3, %s386
      $region44: #{discriminator_forward.6} parent=39 // pred_fallthru
        _
    $region40: #{discriminator_forward.6} parent=5 // pred_fallthru
      _
  $region6: #{discriminator_forward.6} parent=0 // loop_footer
    %s13 = sadd.s32 1, %s9
  $region7: #{discriminator_forward.6} parent=0 // loop_footer_branch
    %8 = sbr.rel target = $region3
  $region8: #{discriminator_forward.6} parent=0 // loop_exit
    _

// kernel: discriminator_forward.7
$region0: #{discriminator_forward.7}
  #allocation0 [shape = 'u32[]', space=smem, size = 0x4, offset = 0x4, fixed_abs, tag = 'smem constant byte address 0x4 - core index']
  #allocation1 [shape = 'u32[72,128]{1,0:T(1,128)}', space=vmem, size = 0x9000, scoped, tag = 'internal scratch']
  %s0 = inlined_call_operand.vmem [shape: bf16[8,512], index: 0, kind: input, shape index: {}]
  %s1 = inlined_call_operand.vmem [shape: bf16[512,64], index: 1, kind: input, shape index: {}]
  %s2 = inlined_call_operand.vmem [shape: f32[3,64], index: 2, kind: input, shape index: {}]
  %s3 = inlined_call_operand.vmem [shape: bf16[8,64], index: 3, kind: output, shape index: {}]
  %s4 = sld [smem:[#allocation0]]
  $region22: #{discriminator_forward.7} parent=0
    _
  %s6 = ssub.s32 1, %s4
  %s7 = scalar_select 0, %s6, %s4
  // Predicated region
  $region2: #{discriminator_forward.7} parent=0 // pred_check
    _
  $region3: #{discriminator_forward.7} parent=0 // pred_check_branch
    %9 = sbr.rel (0) target = $region5
  $region4: #{discriminator_forward.7} parent=0 // pred_region
    _
  $region5: #{discriminator_forward.7} parent=0 // pred_fallthru
    _
  // Predicated region
  $region6: #{discriminator_forward.7} parent=0 // pred_check
    _
  $region7: #{discriminator_forward.7} parent=0 // pred_check_branch
    %11 = sbr.rel (0) target = $region9
  $region8: #{discriminator_forward.7} parent=0 // pred_region
    _
  $region9: #{discriminator_forward.7} parent=0 // pred_fallthru
    _
  // Predicated region
  $region10: #{discriminator_forward.7} parent=0 // pred_check
    _
  $region11: #{discriminator_forward.7} parent=0 // pred_check_branch
    %13 = sbr.rel (0) target = $region13
  $region12: #{discriminator_forward.7} parent=0 // pred_region
    _
  $region13: #{discriminator_forward.7} parent=0 // pred_fallthru
    _
  %v14 = vld [vmem:[%s0] sm:$0xff]
  %v15 = vld [vmem:[%s0 + $0x8] sm:$0xff]
  %v16 = vld [vmem:[%s1] sm:$0xf]
  %v17 = vld [vmem:[%s1 + $0x4] sm:$0xf]
  %v18 = vld [vmem:[%s1 + $0x8] sm:$0xf]
  %v19 = vld [vmem:[%s1 + $0xc] sm:$0xf]
  %v20 = vld [vmem:[%s1 + $0x10] sm:$0xf]
  %v21 = vld [vmem:[%s1 + $0x14] sm:$0xf]
  %v22 = vld [vmem:[%s1 + $0x18] sm:$0xf]
  %v23 = vld [vmem:[%s1 + $0x1c] sm:$0xf]
  %v24 = vld [vmem:[%s1 + $0x20] sm:$0xf]
  %v25 = vld [vmem:[%s1 + $0x24] sm:$0xf]
  %v26 = vld [vmem:[%s1 + $0x28] sm:$0xf]
  %v27 = vld [vmem:[%s1 + $0x2c] sm:$0xf]
  %v28 = vld [vmem:[%s1 + $0x30] sm:$0xf]
  %v29 = vld [vmem:[%s1 + $0x34] sm:$0xf]
  %v30 = vld [vmem:[%s1 + $0x38] sm:$0xf]
  %v31 = vld [vmem:[%s1 + $0x3c] sm:$0xf]
  %v32 = vld [vmem:[%s1 + $0x40] sm:$0xf]
  %v33 = vld [vmem:[%s1 + $0x44] sm:$0xf]
  %v34 = vld [vmem:[%s1 + $0x48] sm:$0xf]
  %v35 = vld [vmem:[%s1 + $0x4c] sm:$0xf]
  %v36 = vld [vmem:[%s1 + $0x50] sm:$0xf]
  %v37 = vld [vmem:[%s1 + $0x54] sm:$0xf]
  %v38 = vld [vmem:[%s1 + $0x58] sm:$0xf]
  %v39 = vld [vmem:[%s1 + $0x5c] sm:$0xf]
  %v40 = vld [vmem:[%s1 + $0x60] sm:$0xf]
  %v41 = vld [vmem:[%s1 + $0x64] sm:$0xf]
  %v42 = vld [vmem:[%s1 + $0x68] sm:$0xf]
  %v43 = vld [vmem:[%s1 + $0x6c] sm:$0xf]
  %v44 = vld [vmem:[%s1 + $0x70] sm:$0xf]
  %v45 = vld [vmem:[%s1 + $0x74] sm:$0xf]
  %v46 = vld [vmem:[%s1 + $0x78] sm:$0xf]
  %v47 = vld [vmem:[%s1 + $0x7c] sm:$0xf]
  %v48 = vld [vmem:[%s1 + $0x80] sm:$0xf]
  %v49 = vld [vmem:[%s1 + $0x84] sm:$0xf]
  %v50 = vld [vmem:[%s1 + $0x88] sm:$0xf]
  %v51 = vld [vmem:[%s1 + $0x8c] sm:$0xf]
  %v52 = vld [vmem:[%s1 + $0x90] sm:$0xf]
  %v53 = vld [vmem:[%s1 + $0x94] sm:$0xf]
  %v54 = vld [vmem:[%s1 + $0x98] sm:$0xf]
  %v55 = vld [vmem:[%s1 + $0x9c] sm:$0xf]
  %v56 = vld [vmem:[%s1 + $0xa0] sm:$0xf]
  %v57 = vld [vmem:[%s1 + $0xa4] sm:$0xf]
  %v58 = vld [vmem:[%s1 + $0xa8] sm:$0xf]
  %v59 = vld [vmem:[%s1 + $0xac] sm:$0xf]
  %v60 = vld [vmem:[%s1 + $0xb0] sm:$0xf]
  %v61 = vld [vmem:[%s1 + $0xb4] sm:$0xf]
  %v62 = vld [vmem:[%s1 + $0xb8] sm:$0xf]
  %v63 = vld [vmem:[%s1 + $0xbc] sm:$0xf]
  %v64 = vld [vmem:[%s1 + $0xc0] sm:$0xf]
  %v65 = vld [vmem:[%s1 + $0xc4] sm:$0xf]
  %v66 = vld [vmem:[%s1 + $0xc8] sm:$0xf]
  %v67 = vld [vmem:[%s1 + $0xcc] sm:$0xf]
  %v68 = vld [vmem:[%s1 + $0xd0] sm:$0xf]
  %v69 = vld [vmem:[%s1 + $0xd4] sm:$0xf]
  %v70 = vld [vmem:[%s1 + $0xd8] sm:$0xf]
  %v71 = vld [vmem:[%s1 + $0xdc] sm:$0xf]
  %v72 = vld [vmem:[%s1 + $0xe0] sm:$0xf]
  %v73 = vld [vmem:[%s1 + $0xe4] sm:$0xf]
  %v74 = vld [vmem:[%s1 + $0xe8] sm:$0xf]
  %v75 = vld [vmem:[%s1 + $0xec] sm:$0xf]
  %v76 = vld [vmem:[%s1 + $0xf0] sm:$0xf]
  %v77 = vld [vmem:[%s1 + $0xf4] sm:$0xf]
  %v78 = vld [vmem:[%s1 + $0xf8] sm:$0xf]
  %v79 = vld [vmem:[%s1 + $0xfc] sm:$0xf]
  %v80 = vld [vmem:[%s2] sm:$0x1]
  %v81 = vperm.slane %v80, 0
  %v84 = vunpack.c.l.b16 %v14
  %v85 = vunpack.c.h.b16 %v14
  %v86 = vunpack.c.l.b16 %v15
  %v87 = vunpack.c.h.b16 %v15
  %v88 = vpack.c.b16 %v84, %v84
  %v89 = vpack.c.b16 %v85, %v85
  %v90 = vpack.c.b16 %v86, %v86
  %v91 = vpack.c.b16 %v87, %v87
  %v160 = vunpack.c.l.b16 %v16
  %v161 = vunpack.c.l.b16 %v17
  %v162 = vunpack.c.l.b16 %v18
  %v163 = vunpack.c.l.b16 %v19
  %v164 = vunpack.c.l.b16 %v20
  %v165 = vunpack.c.l.b16 %v21
  %v166 = vunpack.c.l.b16 %v22
  %v167 = vunpack.c.l.b16 %v23
  %v168 = vunpack.c.l.b16 %v24
  %v169 = vunpack.c.l.b16 %v25
  %v170 = vunpack.c.l.b16 %v26
  %v171 = vunpack.c.l.b16 %v27
  %v172 = vunpack.c.l.b16 %v28
  %v173 = vunpack.c.l.b16 %v29
  %v174 = vunpack.c.l.b16 %v30
  %v175 = vunpack.c.l.b16 %v31
  %v176 = vunpack.c.l.b16 %v32
  %v177 = vunpack.c.l.b16 %v33
  %v178 = vunpack.c.l.b16 %v34
  %v179 = vunpack.c.l.b16 %v35
  %v180 = vunpack.c.l.b16 %v36
  %v181 = vunpack.c.l.b16 %v37
  %v182 = vunpack.c.l.b16 %v38
  %v183 = vunpack.c.l.b16 %v39
  %v184 = vunpack.c.l.b16 %v40
  %v185 = vunpack.c.l.b16 %v41
  %v186 = vunpack.c.l.b16 %v42
  %v187 = vunpack.c.l.b16 %v43
  %v188 = vunpack.c.l.b16 %v44
  %v189 = vunpack.c.l.b16 %v45
  %v190 = vunpack.c.l.b16 %v46
  %v191 = vunpack.c.l.b16 %v47
  %v192 = vunpack.c.l.b16 %v48
  %v193 = vunpack.c.l.b16 %v49
  %v194 = vunpack.c.l.b16 %v50
  %v195 = vunpack.c.l.b16 %v51
  %v196 = vunpack.c.l.b16 %v52
  %v197 = vunpack.c.l.b16 %v53
  %v198 = vunpack.c.l.b16 %v54
  %v199 = vunpack.c.l.b16 %v55
  %v200 = vunpack.c.l.b16 %v56
  %v201 = vunpack.c.l.b16 %v57
  %v202 = vunpack.c.l.b16 %v58
  %v203 = vunpack.c.l.b16 %v59
  %v204 = vunpack.c.l.b16 %v60
  %v205 = vunpack.c.l.b16 %v61
  %v206 = vunpack.c.l.b16 %v62
  %v207 = vunpack.c.l.b16 %v63
  %v208 = vunpack.c.l.b16 %v64
  %v209 = vunpack.c.l.b16 %v65
  %v210 = vunpack.c.l.b16 %v66
  %v211 = vunpack.c.l.b16 %v67
  %v212 = vunpack.c.l.b16 %v68
  %v213 = vunpack.c.l.b16 %v69
  %v214 = vunpack.c.l.b16 %v70
  %v215 = vunpack.c.l.b16 %v71
  %v216 = vunpack.c.l.b16 %v72
  %v217 = vunpack.c.l.b16 %v73
  %v218 = vunpack.c.l.b16 %v74
  %v219 = vunpack.c.l.b16 %v75
  %v220 = vunpack.c.l.b16 %v76
  %v221 = vunpack.c.l.b16 %v77
  %v222 = vunpack.c.l.b16 %v78
  %v223 = vunpack.c.l.b16 %v79
  %v224 = vpack.c.b16 %v161, %v160
  %v225 = vpack.c.b16 %v163, %v162
  %v226 = vpack.c.b16 %v165, %v164
  %v227 = vpack.c.b16 %v167, %v166
  %v228 = vpack.c.b16 %v169, %v168
  %v229 = vpack.c.b16 %v171, %v170
  %v230 = vpack.c.b16 %v173, %v172
  %v231 = vpack.c.b16 %v175, %v174
  %v232 = vpack.c.b16 %v177, %v176
  %v233 = vpack.c.b16 %v179, %v178
  %v234 = vpack.c.b16 %v181, %v180
  %v235 = vpack.c.b16 %v183, %v182
  %v236 = vpack.c.b16 %v185, %v184
  %v237 = vpack.c.b16 %v187, %v186
  %v238 = vpack.c.b16 %v189, %v188
  %v239 = vpack.c.b16 %v191, %v190
  %v240 = vpack.c.b16 %v193, %v192
  %v241 = vpack.c.b16 %v195, %v194
  %v242 = vpack.c.b16 %v197, %v196
  %v243 = vpack.c.b16 %v199, %v198
  %v244 = vpack.c.b16 %v201, %v200
  %v245 = vpack.c.b16 %v203, %v202
  %v246 = vpack.c.b16 %v205, %v204
  %v247 = vpack.c.b16 %v207, %v206
  %v248 = vpack.c.b16 %v209, %v208
  %v249 = vpack.c.b16 %v211, %v210
  %v250 = vpack.c.b16 %v213, %v212
  %v251 = vpack.c.b16 %v215, %v214
  %v252 = vpack.c.b16 %v217, %v216
  %v253 = vpack.c.b16 %v219, %v218
  %v254 = vpack.c.b16 %v221, %v220
  %v255 = vpack.c.b16 %v223, %v222
  %288 = vmatpush.bf16.msra.mxu0 %v231
  %289 = vmatpush.bf16.msra.mxu0 %v230
  %290 = vmatpush.bf16.msra.mxu0 %v229
  %291 = vmatpush.bf16.msra.mxu0 %v228
  %292 = vmatpush.bf16.msra.mxu0 %v227
  %293 = vmatpush.bf16.msra.mxu0 %v226
  %294 = vmatpush.bf16.msra.mxu0 %v225
  %295 = vmatpush.bf16.msra.mxu0 %v224
  %296 = vmatmul.bf16.gmra.mxu0 %v88
  %v297 = vpop.f32.mrf.mxu0
  %v298 = vadd.f32 %v81, %v297
  %v299 = vpop.f32.mrf.mxu0
  %300 = vdwg.mxu0
  %301 = vmatpush.bf16.msra.mxu0 %v239
  %302 = vmatpush.bf16.msra.mxu0 %v238
  %303 = vmatpush.bf16.msra.mxu0 %v237
  %304 = vmatpush.bf16.msra.mxu0 %v236
  %305 = vmatpush.bf16.msra.mxu0 %v235
  %306 = vmatpush.bf16.msra.mxu0 %v234
  %307 = vmatpush.bf16.msra.mxu0 %v233
  %308 = vmatpush.bf16.msra.mxu0 %v232
  %309 = vmatmul.bf16.gmra.mxu0 %v89
  %v310 = vpop.f32.mrf.mxu0
  %v311 = vadd.f32 %v298, %v310
  %v312 = vpop.f32.mrf.mxu0
  %313 = vdwg.mxu0
  %314 = vmatpush.bf16.msra.mxu0 %v247
  %315 = vmatpush.bf16.msra.mxu0 %v246
  %316 = vmatpush.bf16.msra.mxu0 %v245
  %317 = vmatpush.bf16.msra.mxu0 %v244
  %318 = vmatpush.bf16.msra.mxu0 %v243
  %319 = vmatpush.bf16.msra.mxu0 %v242
  %320 = vmatpush.bf16.msra.mxu0 %v241
  %321 = vmatpush.bf16.msra.mxu0 %v240
  %322 = vmatmul.bf16.gmra.mxu0 %v90
  %v323 = vpop.f32.mrf.mxu0
  %v324 = vadd.f32 %v311, %v323
  %v325 = vpop.f32.mrf.mxu0
  %326 = vdwg.mxu0
  %327 = vmatpush.bf16.msra.mxu0 %v255
  %328 = vmatpush.bf16.msra.mxu0 %v254
  %329 = vmatpush.bf16.msra.mxu0 %v253
  %330 = vmatpush.bf16.msra.mxu0 %v252
  %331 = vmatpush.bf16.msra.mxu0 %v251
  %332 = vmatpush.bf16.msra.mxu0 %v250
  %333 = vmatpush.bf16.msra.mxu0 %v249
  %334 = vmatpush.bf16.msra.mxu0 %v248
  %335 = vmatmul.bf16.gmra.mxu0 %v91
  %v336 = vpop.f32.mrf.mxu0
  %v337 = vadd.f32 %v324, %v336
  %v338 = vpop.f32.mrf.mxu0
  %339 = vdwg.mxu0
  %vm340 = vcmp.gt.f32.partialorder %v337, 0.0
  %v341 = vmul.f32 %v337, 0.2
  %v342 = vsel %vm340, %v337, %v341
  %v343 = vld [vmem:[%s2 + $0x1] sm:$0x1]
  %v344 = vperm.slane %v343, 0
  %v345 = vmul.f32 %v342, %v344
  %v346 = vld [vmem:[%s2 + $0x2] sm:$0x1]
  %v347 = vperm.slane %v346, 0
  %v348 = vadd.f32 %v345, %v347
  %v349 = vpack.c.bf16 %v348, %v348
  %vm350 = vcmask 519168
  %351 = vst.msk [vmem:[%s3] sm:$0xf] %vm350, %v349
  // Predicated region
  $region14: #{discriminator_forward.7} parent=0 // pred_check
    _
  $region15: #{discriminator_forward.7} parent=0 // pred_check_branch
    %353 = sbr.rel (0) target = $region17
  $region16: #{discriminator_forward.7} parent=0 // pred_region
    _
  $region17: #{discriminator_forward.7} parent=0 // pred_fallthru
    _
  // Predicated region
  $region18: #{discriminator_forward.7} parent=0 // pred_check
    _
  $region19: #{discriminator_forward.7} parent=0 // pred_check_branch
    %355 = sbr.rel (0) target = $region21
  $region20: #{discriminator_forward.7} parent=0 // pred_region
    _
  $region21: #{discriminator_forward.7} parent=0 // pred_fallthru
    _

// kernel: discriminator_forward.8
$region0: #{discriminator_forward.8}
  #allocation0 [shape = 'u32[]', space=smem, size = 0x4, offset = 0x4, fixed_abs, tag = 'smem constant byte address 0x4 - core index']
  #allocation1 [shape = 'u32[72,128]{1,0:T(1,128)}', space=vmem, size = 0x9000, scoped, tag = 'internal scratch']
  %s0 = inlined_call_operand.vmem [shape: bf16[8,1024], index: 0, kind: input, shape index: {}]
  %s1 = inlined_call_operand.vmem [shape: bf16[1024,128], index: 1, kind: input, shape index: {}]
  %s2 = inlined_call_operand.vmem [shape: f32[3,128], index: 2, kind: input, shape index: {}]
  %s3 = inlined_call_operand.vmem [shape: bf16[8,128], index: 3, kind: output, shape index: {}]
  %s4 = sld [smem:[#allocation0]]
  $region22: #{discriminator_forward.8} parent=0
    _
  %s6 = ssub.s32 1, %s4
  %s7 = scalar_select 0, %s6, %s4
  // Predicated region
  $region2: #{discriminator_forward.8} parent=0 // pred_check
    _
  $region3: #{discriminator_forward.8} parent=0 // pred_check_branch
    %9 = sbr.rel (0) target = $region5
  $region4: #{discriminator_forward.8} parent=0 // pred_region
    _
  $region5: #{discriminator_forward.8} parent=0 // pred_fallthru
    _
  // Predicated region
  $region6: #{discriminator_forward.8} parent=0 // pred_check
    _
  $region7: #{discriminator_forward.8} parent=0 // pred_check_branch
    %11 = sbr.rel (0) target = $region9
  $region8: #{discriminator_forward.8} parent=0 // pred_region
    _
  $region9: #{discriminator_forward.8} parent=0 // pred_fallthru
    _
  // Predicated region
  $region10: #{discriminator_forward.8} parent=0 // pred_check
    _
  $region11: #{discriminator_forward.8} parent=0 // pred_check_branch
    %13 = sbr.rel (0) target = $region13
  $region12: #{discriminator_forward.8} parent=0 // pred_region
    _
  $region13: #{discriminator_forward.8} parent=0 // pred_fallthru
    _
  %v14 = vld [vmem:[%s0] sm:$0xff]
  %v15 = vld [vmem:[%s0 + $0x8] sm:$0xff]
  %v16 = vld [vmem:[%s0 + $0x10] sm:$0xff]
  %v17 = vld [vmem:[%s0 + $0x18] sm:$0xff]
  %v18 = vld [vmem:[%s1] sm:$0xf]
  %v19 = vld [vmem:[%s1 + $0x4] sm:$0xf]
  %v20 = vld [vmem:[%s1 + $0x8] sm:$0xf]
  %v21 = vld [vmem:[%s1 + $0xc] sm:$0xf]
  %v22 = vld [vmem:[%s1 + $0x10] sm:$0xf]
  %v23 = vld [vmem:[%s1 + $0x14] sm:$0xf]
  %v24 = vld [vmem:[%s1 + $0x18] sm:$0xf]
  %v25 = vld [vmem:[%s1 + $0x1c] sm:$0xf]
  %v26 = vld [vmem:[%s1 + $0x20] sm:$0xf]
  %v27 = vld [vmem:[%s1 + $0x24] sm:$0xf]
  %v28 = vld [vmem:[%s1 + $0x28] sm:$0xf]
  %v29 = vld [vmem:[%s1 + $0x2c] sm:$0xf]
  %v30 = vld [vmem:[%s1 + $0x30] sm:$0xf]
  %v31 = vld [vmem:[%s1 + $0x34] sm:$0xf]
  %v32 = vld [vmem:[%s1 + $0x38] sm:$0xf]
  %v33 = vld [vmem:[%s1 + $0x3c] sm:$0xf]
  %v34 = vld [vmem:[%s1 + $0x40] sm:$0xf]
  %v35 = vld [vmem:[%s1 + $0x44] sm:$0xf]
  %v36 = vld [vmem:[%s1 + $0x48] sm:$0xf]
  %v37 = vld [vmem:[%s1 + $0x4c] sm:$0xf]
  %v38 = vld [vmem:[%s1 + $0x50] sm:$0xf]
  %v39 = vld [vmem:[%s1 + $0x54] sm:$0xf]
  %v40 = vld [vmem:[%s1 + $0x58] sm:$0xf]
  %v41 = vld [vmem:[%s1 + $0x5c] sm:$0xf]
  %v42 = vld [vmem:[%s1 + $0x60] sm:$0xf]
  %v43 = vld [vmem:[%s1 + $0x64] sm:$0xf]
  %v44 = vld [vmem:[%s1 + $0x68] sm:$0xf]
  %v45 = vld [vmem:[%s1 + $0x6c] sm:$0xf]
  %v46 = vld [vmem:[%s1 + $0x70] sm:$0xf]
  %v47 = vld [vmem:[%s1 + $0x74] sm:$0xf]
  %v48 = vld [vmem:[%s1 + $0x78] sm:$0xf]
  %v49 = vld [vmem:[%s1 + $0x7c] sm:$0xf]
  %v50 = vld [vmem:[%s1 + $0x80] sm:$0xf]
  %v51 = vld [vmem:[%s1 + $0x84] sm:$0xf]
  %v52 = vld [vmem:[%s1 + $0x88] sm:$0xf]
  %v53 = vld [vmem:[%s1 + $0x8c] sm:$0xf]
  %v54 = vld [vmem:[%s1 + $0x90] sm:$0xf]
  %v55 = vld [vmem:[%s1 + $0x94] sm:$0xf]
  %v56 = vld [vmem:[%s1 + $0x98] sm:$0xf]
  %v57 = vld [vmem:[%s1 + $0x9c] sm:$0xf]
  %v58 = vld [vmem:[%s1 + $0xa0] sm:$0xf]
  %v59 = vld [vmem:[%s1 + $0xa4] sm:$0xf]
  %v60 = vld [vmem:[%s1 + $0xa8] sm:$0xf]
  %v61 = vld [vmem:[%s1 + $0xac] sm:$0xf]
  %v62 = vld [vmem:[%s1 + $0xb0] sm:$0xf]
  %v63 = vld [vmem:[%s1 + $0xb4] sm:$0xf]
  %v64 = vld [vmem:[%s1 + $0xb8] sm:$0xf]
  %v65 = vld [vmem:[%s1 + $0xbc] sm:$0xf]
  %v66 = vld [vmem:[%s1 + $0xc0] sm:$0xf]
  %v67 = vld [vmem:[%s1 + $0xc4] sm:$0xf]
  %v68 = vld [vmem:[%s1 + $0xc8] sm:$0xf]
  %v69 = vld [vmem:[%s1 + $0xcc] sm:$0xf]
  %v70 = vld [vmem:[%s1 + $0xd0] sm:$0xf]
  %v71 = vld [vmem:[%s1 + $0xd4] sm:$0xf]
  %v72 = vld [vmem:[%s1 + $0xd8] sm:$0xf]
  %v73 = vld [vmem:[%s1 + $0xdc] sm:$0xf]
  %v74 = vld [vmem:[%s1 + $0xe0] sm:$0xf]
  %v75 = vld [vmem:[%s1 + $0xe4] sm:$0xf]
  %v76 = vld [vmem:[%s1 + $0xe8] sm:$0xf]
  %v77 = vld [vmem:[%s1 + $0xec] sm:$0xf]
  %v78 = vld [vmem:[%s1 + $0xf0] sm:$0xf]
  %v79 = vld [vmem:[%s1 + $0xf4] sm:$0xf]
  %v80 = vld [vmem:[%s1 + $0xf8] sm:$0xf]
  %v81 = vld [vmem:[%s1 + $0xfc] sm:$0xf]
  %v82 = vld [vmem:[%s1 + $0x100] sm:$0xf]
  %v83 = vld [vmem:[%s1 + $0x104] sm:$0xf]
  %v84 = vld [vmem:[%s1 + $0x108] sm:$0xf]
  %v85 = vld [vmem:[%s1 + $0x10c] sm:$0xf]
  %v86 = vld [vmem:[%s1 + $0x110] sm:$0xf]
  %v87 = vld [vmem:[%s1 + $0x114] sm:$0xf]
  %v88 = vld [vmem:[%s1 + $0x118] sm:$0xf]
  %v89 = vld [vmem:[%s1 + $0x11c] sm:$0xf]
  %v90 = vld [vmem:[%s1 + $0x120] sm:$0xf]
  %v91 = vld [vmem:[%s1 + $0x124] sm:$0xf]
  %v92 = vld [vmem:[%s1 + $0x128] sm:$0xf]
  %v93 = vld [vmem:[%s1 + $0x12c] sm:$0xf]
  %v94 = vld [vmem:[%s1 + $0x130] sm:$0xf]
  %v95 = vld [vmem:[%s1 + $0x134] sm:$0xf]
  %v96 = vld [vmem:[%s1 + $0x138] sm:$0xf]
  %v97 = vld [vmem:[%s1 + $0x13c] sm:$0xf]
  %v98 = vld [vmem:[%s1 + $0x140] sm:$0xf]
  %v99 = vld [vmem:[%s1 + $0x144] sm:$0xf]
  %v100 = vld [vmem:[%s1 + $0x148] sm:$0xf]
  %v101 = vld [vmem:[%s1 + $0x14c] sm:$0xf]
  %v102 = vld [vmem:[%s1 + $0x150] sm:$0xf]
  %v103 = vld [vmem:[%s1 + $0x154] sm:$0xf]
  %v104 = vld [vmem:[%s1 + $0x158] sm:$0xf]
  %v105 = vld [vmem:[%s1 + $0x15c] sm:$0xf]
  %v106 = vld [vmem:[%s1 + $0x160] sm:$0xf]
  %v107 = vld [vmem:[%s1 + $0x164] sm:$0xf]
  %v108 = vld [vmem:[%s1 + $0x168] sm:$0xf]
  %v109 = vld [vmem:[%s1 + $0x16c] sm:$0xf]
  %v110 = vld [vmem:[%s1 + $0x170] sm:$0xf]
  %v111 = vld [vmem:[%s1 + $0x174] sm:$0xf]
  %v112 = vld [vmem:[%s1 + $0x178] sm:$0xf]
  %v113 = vld [vmem:[%s1 + $0x17c] sm:$0xf]
  %v114 = vld [vmem:[%s1 + $0x180] sm:$0xf]
  %v115 = vld [vmem:[%s1 + $0x184] sm:$0xf]
  %v116 = vld [vmem:[%s1 + $0x188] sm:$0xf]
  %v117 = vld [vmem:[%s1 + $0x18c] sm:$0xf]
  %v118 = vld [vmem:[%s1 + $0x190] sm:$0xf]
  %v119 = vld [vmem:[%s1 + $0x194] sm:$0xf]
  %v120 = vld [vmem:[%s1 + $0x198] sm:$0xf]
  %v121 = vld [vmem:[%s1 + $0x19c] sm:$0xf]
  %v122 = vld [vmem:[%s1 + $0x1a0] sm:$0xf]
  %v123 = vld [vmem:[%s1 + $0x1a4] sm:$0xf]
  %v124 = vld [vmem:[%s1 + $0x1a8] sm:$0xf]
  %v125 = vld [vmem:[%s1 + $0x1ac] sm:$0xf]
  %v126 = vld [vmem:[%s1 + $0x1b0] sm:$0xf]
  %v127 = vld [vmem:[%s1 + $0x1b4] sm:$0xf]
  %v128 = vld [vmem:[%s1 + $0x1b8] sm:$0xf]
  %v129 = vld [vmem:[%s1 + $0x1bc] sm:$0xf]
  %v130 = vld [vmem:[%s1 + $0x1c0] sm:$0xf]
  %v131 = vld [vmem:[%s1 + $0x1c4] sm:$0xf]
  %v132 = vld [vmem:[%s1 + $0x1c8] sm:$0xf]
  %v133 = vld [vmem:[%s1 + $0x1cc] sm:$0xf]
  %v134 = vld [vmem:[%s1 + $0x1d0] sm:$0xf]
  %v135 = vld [vmem:[%s1 + $0x1d4] sm:$0xf]
  %v136 = vld [vmem:[%s1 + $0x1d8] sm:$0xf]
  %v137 = vld [vmem:[%s1 + $0x1dc] sm:$0xf]
  %v138 = vld [vmem:[%s1 + $0x1e0] sm:$0xf]
  %v139 = vld [vmem:[%s1 + $0x1e4] sm:$0xf]
  %v140 = vld [vmem:[%s1 + $0x1e8] sm:$0xf]
  %v141 = vld [vmem:[%s1 + $0x1ec] sm:$0xf]
  %v142 = vld [vmem:[%s1 + $0x1f0] sm:$0xf]
  %v143 = vld [vmem:[%s1 + $0x1f4] sm:$0xf]
  %v144 = vld [vmem:[%s1 + $0x1f8] sm:$0xf]
  %v145 = vld [vmem:[%s1 + $0x1fc] sm:$0xf]
  %v146 = vld [vmem:[%s2] sm:$0x1]
  %v147 = vperm.slane %v146, 0
  %v152 = vunpack.c.l.b16 %v14
  %v153 = vunpack.c.h.b16 %v14
  %v154 = vunpack.c.l.b16 %v15
  %v155 = vunpack.c.h.b16 %v15
  %v156 = vunpack.c.l.b16 %v16
  %v157 = vunpack.c.h.b16 %v16
  %v158 = vunpack.c.l.b16 %v17
  %v159 = vunpack.c.h.b16 %v17
  %v160 = vpack.c.b16 %v152, %v152
  %v161 = vpack.c.b16 %v153, %v153
  %v162 = vpack.c.b16 %v154, %v154
  %v163 = vpack.c.b16 %v155, %v155
  %v164 = vpack.c.b16 %v156, %v156
  %v165 = vpack.c.b16 %v157, %v157
  %v166 = vpack.c.b16 %v158, %v158
  %v167 = vpack.c.b16 %v159, %v159
  %v304 = vunpack.c.l.b16 %v18
  %v305 = vunpack.c.l.b16 %v19
  %v306 = vunpack.c.l.b16 %v20
  %v307 = vunpack.c.l.b16 %v21
  %v308 = vunpack.c.l.b16 %v22
  %v309 = vunpack.c.l.b16 %v23
  %v310 = vunpack.c.l.b16 %v24
  %v311 = vunpack.c.l.b16 %v25
  %v312 = vunpack.c.l.b16 %v26
  %v313 = vunpack.c.l.b16 %v27
  %v314 = vunpack.c.l.b16 %v28
  %v315 = vunpack.c.l.b16 %v29
  %v316 = vunpack.c.l.b16 %v30
  %v317 = vunpack.c.l.b16 %v31
  %v318 = vunpack.c.l.b16 %v32
  %v319 = vunpack.c.l.b16 %v33
  %v320 = vunpack.c.l.b16 %v34
  %v321 = vunpack.c.l.b16 %v35
  %v322 = vunpack.c.l.b16 %v36
  %v323 = vunpack.c.l.b16 %v37
  %v324 = vunpack.c.l.b16 %v38
  %v325 = vunpack.c.l.b16 %v39
  %v326 = vunpack.c.l.b16 %v40
  %v327 = vunpack.c.l.b16 %v41
  %v328 = vunpack.c.l.b16 %v42
  %v329 = vunpack.c.l.b16 %v43
  %v330 = vunpack.c.l.b16 %v44
  %v331 = vunpack.c.l.b16 %v45
  %v332 = vunpack.c.l.b16 %v46
  %v333 = vunpack.c.l.b16 %v47
  %v334 = vunpack.c.l.b16 %v48
  %v335 = vunpack.c.l.b16 %v49
  %v336 = vunpack.c.l.b16 %v50
  %v337 = vunpack.c.l.b16 %v51
  %v338 = vunpack.c.l.b16 %v52
  %v339 = vunpack.c.l.b16 %v53
  %v340 = vunpack.c.l.b16 %v54
  %v341 = vunpack.c.l.b16 %v55
  %v342 = vunpack.c.l.b16 %v56
  %v343 = vunpack.c.l.b16 %v57
  %v344 = vunpack.c.l.b16 %v58
  %v345 = vunpack.c.l.b16 %v59
  %v346 = vunpack.c.l.b16 %v60
  %v347 = vunpack.c.l.b16 %v61
  %v348 = vunpack.c.l.b16 %v62
  %v349 = vunpack.c.l.b16 %v63
  %v350 = vunpack.c.l.b16 %v64
  %v351 = vunpack.c.l.b16 %v65
  %v352 = vunpack.c.l.b16 %v66
  %v353 = vunpack.c.l.b16 %v67
  %v354 = vunpack.c.l.b16 %v68
  %v355 = vunpack.c.l.b16 %v69
  %v356 = vunpack.c.l.b16 %v70
  %v357 = vunpack.c.l.b16 %v71
  %v358 = vunpack.c.l.b16 %v72
  %v359 = vunpack.c.l.b16 %v73
  %v360 = vunpack.c.l.b16 %v74
  %v361 = vunpack.c.l.b16 %v75
  %v362 = vunpack.c.l.b16 %v76
  %v363 = vunpack.c.l.b16 %v77
  %v364 = vunpack.c.l.b16 %v78
  %v365 = vunpack.c.l.b16 %v79
  %v366 = vunpack.c.l.b16 %v80
  %v367 = vunpack.c.l.b16 %v81
  %v368 = vunpack.c.l.b16 %v82
  %v369 = vunpack.c.l.b16 %v83
  %v370 = vunpack.c.l.b16 %v84
  %v371 = vunpack.c.l.b16 %v85
  %v372 = vunpack.c.l.b16 %v86
  %v373 = vunpack.c.l.b16 %v87
  %v374 = vunpack.c.l.b16 %v88
  %v375 = vunpack.c.l.b16 %v89
  %v376 = vunpack.c.l.b16 %v90
  %v377 = vunpack.c.l.b16 %v91
  %v378 = vunpack.c.l.b16 %v92
  %v379 = vunpack.c.l.b16 %v93
  %v380 = vunpack.c.l.b16 %v94
  %v381 = vunpack.c.l.b16 %v95
  %v382 = vunpack.c.l.b16 %v96
  %v383 = vunpack.c.l.b16 %v97
  %v384 = vunpack.c.l.b16 %v98
  %v385 = vunpack.c.l.b16 %v99
  %v386 = vunpack.c.l.b16 %v100
  %v387 = vunpack.c.l.b16 %v101
  %v388 = vunpack.c.l.b16 %v102
  %v389 = vunpack.c.l.b16 %v103
  %v390 = vunpack.c.l.b16 %v104
  %v391 = vunpack.c.l.b16 %v105
  %v392 = vunpack.c.l.b16 %v106
  %v393 = vunpack.c.l.b16 %v107
  %v394 = vunpack.c.l.b16 %v108
  %v395 = vunpack.c.l.b16 %v109
  %v396 = vunpack.c.l.b16 %v110
  %v397 = vunpack.c.l.b16 %v111
  %v398 = vunpack.c.l.b16 %v112
  %v399 = vunpack.c.l.b16 %v113
  %v400 = vunpack.c.l.b16 %v114
  %v401 = vunpack.c.l.b16 %v115
  %v402 = vunpack.c.l.b16 %v116
  %v403 = vunpack.c.l.b16 %v117
  %v404 = vunpack.c.l.b16 %v118
  %v405 = vunpack.c.l.b16 %v119
  %v406 = vunpack.c.l.b16 %v120
  %v407 = vunpack.c.l.b16 %v121
  %v408 = vunpack.c.l.b16 %v122
  %v409 = vunpack.c.l.b16 %v123
  %v410 = vunpack.c.l.b16 %v124
  %v411 = vunpack.c.l.b16 %v125
  %v412 = vunpack.c.l.b16 %v126
  %v413 = vunpack.c.l.b16 %v127
  %v414 = vunpack.c.l.b16 %v128
  %v415 = vunpack.c.l.b16 %v129
  %v416 = vunpack.c.l.b16 %v130
  %v417 = vunpack.c.l.b16 %v131
  %v418 = vunpack.c.l.b16 %v132
  %v419 = vunpack.c.l.b16 %v133
  %v420 = vunpack.c.l.b16 %v134
  %v421 = vunpack.c.l.b16 %v135
  %v422 = vunpack.c.l.b16 %v136
  %v423 = vunpack.c.l.b16 %v137
  %v424 = vunpack.c.l.b16 %v138
  %v425 = vunpack.c.l.b16 %v139
  %v426 = vunpack.c.l.b16 %v140
  %v427 = vunpack.c.l.b16 %v141
  %v428 = vunpack.c.l.b16 %v142
  %v429 = vunpack.c.l.b16 %v143
  %v430 = vunpack.c.l.b16 %v144
  %v431 = vunpack.c.l.b16 %v145
  %v432 = vpack.c.b16 %v305, %v304
  %v433 = vpack.c.b16 %v307, %v306
  %v434 = vpack.c.b16 %v309, %v308
  %v435 = vpack.c.b16 %v311, %v310
  %v436 = vpack.c.b16 %v313, %v312
  %v437 = vpack.c.b16 %v315, %v314
  %v438 = vpack.c.b16 %v317, %v316
  %v439 = vpack.c.b16 %v319, %v318
  %v440 = vpack.c.b16 %v321, %v320
  %v441 = vpack.c.b16 %v323, %v322
  %v442 = vpack.c.b16 %v325, %v324
  %v443 = vpack.c.b16 %v327, %v326
  %v444 = vpack.c.b16 %v329, %v328
  %v445 = vpack.c.b16 %v331, %v330
  %v446 = vpack.c.b16 %v333, %v332
  %v447 = vpack.c.b16 %v335, %v334
  %v448 = vpack.c.b16 %v337, %v336
  %v449 = vpack.c.b16 %v339, %v338
  %v450 = vpack.c.b16 %v341, %v340
  %v451 = vpack.c.b16 %v343, %v342
  %v452 = vpack.c.b16 %v345, %v344
  %v453 = vpack.c.b16 %v347, %v346
  %v454 = vpack.c.b16 %v349, %v348
  %v455 = vpack.c.b16 %v351, %v350
  %v456 = vpack.c.b16 %v353, %v352
  %v457 = vpack.c.b16 %v355, %v354
  %v458 = vpack.c.b16 %v357, %v356
  %v459 = vpack.c.b16 %v359, %v358
  %v460 = vpack.c.b16 %v361, %v360
  %v461 = vpack.c.b16 %v363, %v362
  %v462 = vpack.c.b16 %v365, %v364
  %v463 = vpack.c.b16 %v367, %v366
  %v464 = vpack.c.b16 %v369, %v368
  %v465 = vpack.c.b16 %v371, %v370
  %v466 = vpack.c.b16 %v373, %v372
  %v467 = vpack.c.b16 %v375, %v374
  %v468 = vpack.c.b16 %v377, %v376
  %v469 = vpack.c.b16 %v379, %v378
  %v470 = vpack.c.b16 %v381, %v380
  %v471 = vpack.c.b16 %v383, %v382
  %v472 = vpack.c.b16 %v385, %v384
  %v473 = vpack.c.b16 %v387, %v386
  %v474 = vpack.c.b16 %v389, %v388
  %v475 = vpack.c.b16 %v391, %v390
  %v476 = vpack.c.b16 %v393, %v392
  %v477 = vpack.c.b16 %v395, %v394
  %v478 = vpack.c.b16 %v397, %v396
  %v479 = vpack.c.b16 %v399, %v398
  %v480 = vpack.c.b16 %v401, %v400
  %v481 = vpack.c.b16 %v403, %v402
  %v482 = vpack.c.b16 %v405, %v404
  %v483 = vpack.c.b16 %v407, %v406
  %v484 = vpack.c.b16 %v409, %v408
  %v485 = vpack.c.b16 %v411, %v410
  %v486 = vpack.c.b16 %v413, %v412
  %v487 = vpack.c.b16 %v415, %v414
  %v488 = vpack.c.b16 %v417, %v416
  %v489 = vpack.c.b16 %v419, %v418
  %v490 = vpack.c.b16 %v421, %v420
  %v491 = vpack.c.b16 %v423, %v422
  %v492 = vpack.c.b16 %v425, %v424
  %v493 = vpack.c.b16 %v427, %v426
  %v494 = vpack.c.b16 %v429, %v428
  %v495 = vpack.c.b16 %v431, %v430
  %560 = vmatpush.bf16.msra.mxu0 %v439
  %561 = vmatpush.bf16.msra.mxu0 %v438
  %562 = vmatpush.bf16.msra.mxu0 %v437
  %563 = vmatpush.bf16.msra.mxu0 %v436
  %564 = vmatpush.bf16.msra.mxu0 %v435
  %565 = vmatpush.bf16.msra.mxu0 %v434
  %566 = vmatpush.bf16.msra.mxu0 %v433
  %567 = vmatpush.bf16.msra.mxu0 %v432
  %568 = vmatmul.bf16.gmra.mxu0 %v160
  %v569 = vpop.f32.mrf.mxu0
  %v570 = vadd.f32 %v147, %v569
  %v571 = vpop.f32.mrf.mxu0
  %572 = vdwg.mxu0
  %573 = vmatpush.bf16.msra.mxu0 %v447
  %574 = vmatpush.bf16.msra.mxu0 %v446
  %575 = vmatpush.bf16.msra.mxu0 %v445
  %576 = vmatpush.bf16.msra.mxu0 %v444
  %577 = vmatpush.bf16.msra.mxu0 %v443
  %578 = vmatpush.bf16.msra.mxu0 %v442
  %579 = vmatpush.bf16.msra.mxu0 %v441
  %580 = vmatpush.bf16.msra.mxu0 %v440
  %581 = vmatmul.bf16.gmra.mxu0 %v161
  %v582 = vpop.f32.mrf.mxu0
  %v583 = vadd.f32 %v570, %v582
  %v584 = vpop.f32.mrf.mxu0
  %585 = vdwg.mxu0
  %586 = vmatpush.bf16.msra.mxu0 %v455
  %587 = vmatpush.bf16.msra.mxu0 %v454
  %588 = vmatpush.bf16.msra.mxu0 %v453
  %589 = vmatpush.bf16.msra.mxu0 %v452
  %590 = vmatpush.bf16.msra.mxu0 %v451
  %591 = vmatpush.bf16.msra.mxu0 %v450
  %592 = vmatpush.bf16.msra.mxu0 %v449
  %593 = vmatpush.bf16.msra.mxu0 %v448
  %594 = vmatmul.bf16.gmra.mxu0 %v162
  %v595 = vpop.f32.mrf.mxu0
  %v596 = vadd.f32 %v583, %v595
  %v597 = vpop.f32.mrf.mxu0
  %598 = vdwg.mxu0
  %599 = vmatpush.bf16.msra.mxu0 %v463
  %600 = vmatpush.bf16.msra.mxu0 %v462
  %601 = vmatpush.bf16.msra.mxu0 %v461
  %602 = vmatpush.bf16.msra.mxu0 %v460
  %603 = vmatpush.bf16.msra.mxu0 %v459
  %604 = vmatpush.bf16.msra.mxu0 %v458
  %605 = vmatpush.bf16.msra.mxu0 %v457
  %606 = vmatpush.bf16.msra.mxu0 %v456
  %607 = vmatmul.bf16.gmra.mxu0 %v163
  %v608 = vpop.f32.mrf.mxu0
  %v609 = vadd.f32 %v596, %v608
  %v610 = vpop.f32.mrf.mxu0
  %611 = vdwg.mxu0
  %612 = vmatpush.bf16.msra.mxu0 %v471
  %613 = vmatpush.bf16.msra.mxu0 %v470
  %614 = vmatpush.bf16.msra.mxu0 %v469
  %615 = vmatpush.bf16.msra.mxu0 %v468
  %616 = vmatpush.bf16.msra.mxu0 %v467
  %617 = vmatpush.bf16.msra.mxu0 %v466
  %618 = vmatpush.bf16.msra.mxu0 %v465
  %619 = vmatpush.bf16.msra.mxu0 %v464
  %620 = vmatmul.bf16.gmra.mxu0 %v164
  %v621 = vpop.f32.mrf.mxu0
  %v622 = vadd.f32 %v609, %v621
  %v623 = vpop.f32.mrf.mxu0
  %624 = vdwg.mxu0
  %625 = vmatpush.bf16.msra.mxu0 %v479
  %626 = vmatpush.bf16.msra.mxu0 %v478
  %627 = vmatpush.bf16.msra.mxu0 %v477
  %628 = vmatpush.bf16.msra.mxu0 %v476
  %629 = vmatpush.bf16.msra.mxu0 %v475
  %630 = vmatpush.bf16.msra.mxu0 %v474
  %631 = vmatpush.bf16.msra.mxu0 %v473
  %632 = vmatpush.bf16.msra.mxu0 %v472
  %633 = vmatmul.bf16.gmra.mxu0 %v165
  %v634 = vpop.f32.mrf.mxu0
  %v635 = vadd.f32 %v622, %v634
  %v636 = vpop.f32.mrf.mxu0
  %637 = vdwg.mxu0
  %638 = vmatpush.bf16.msra.mxu0 %v487
  %639 = vmatpush.bf16.msra.mxu0 %v486
  %640 = vmatpush.bf16.msra.mxu0 %v485
  %641 = vmatpush.bf16.msra.mxu0 %v484
  %642 = vmatpush.bf16.msra.mxu0 %v483
  %643 = vmatpush.bf16.msra.mxu0 %v482
  %644 = vmatpush.bf16.msra.mxu0 %v481
  %645 = vmatpush.bf16.msra.mxu0 %v480
  %646 = vmatmul.bf16.gmra.mxu0 %v166
  %v647 = vpop.f32.mrf.mxu0
  %v648 = vadd.f32 %v635, %v647
  %v649 = vpop.f32.mrf.mxu0
  %650 = vdwg.mxu0
  %651 = vmatpush.bf16.msra.mxu0 %v495
  %652 = vmatpush.bf16.msra.mxu0 %v494
  %653 = vmatpush.bf16.msra.mxu0 %v493
  %654 = vmatpush.bf16.msra.mxu0 %v492
  %655 = vmatpush.bf16.msra.mxu0 %v491
  %656 = vmatpush.bf16.msra.mxu0 %v490
  %657 = vmatpush.bf16.msra.mxu0 %v489
  %658 = vmatpush.bf16.msra.mxu0 %v488
  %659 = vmatmul.bf16.gmra.mxu0 %v167
  %v660 = vpop.f32.mrf.mxu0
  %v661 = vadd.f32 %v648, %v660
  %v662 = vpop.f32.mrf.mxu0
  %663 = vdwg.mxu0
  %vm664 = vcmp.gt.f32.partialorder %v661, 0.0
  %v665 = vmul.f32 %v661, 0.2
  %v666 = vsel %vm664, %v661, %v665
  %v667 = vld [vmem:[%s2 + $0x1] sm:$0x1]
  %v668 = vperm.slane %v667, 0
  %v669 = vmul.f32 %v666, %v668
  %v670 = vld [vmem:[%s2 + $0x2] sm:$0x1]
  %v671 = vperm.slane %v670, 0
  %v672 = vadd.f32 %v669, %v671
  %v673 = vpack.c.bf16 %v672, %v672
  %674 = vst [vmem:[%s3] sm:$0xf] %v673
  // Predicated region
  $region14: #{discriminator_forward.8} parent=0 // pred_check
    _
  $region15: #{discriminator_forward.8} parent=0 // pred_check_branch
    %676 = sbr.rel (0) target = $region17
  $region16: #{discriminator_forward.8} parent=0 // pred_region
    _
  $region17: #{discriminator_forward.8} parent=0 // pred_fallthru
    _
  // Predicated region
  $region18: #{discriminator_forward.8} parent=0 // pred_check
    _
  $region19: #{discriminator_forward.8} parent=0 // pred_check_branch
    %678 = sbr.rel (0) target = $region21
  $region20: #{discriminator_forward.8} parent=0 // pred_region
    _
  $region21: #{discriminator_forward.8} parent=0 // pred_fallthru
    _

// kernel: discriminator_forward.9
$region0: #{discriminator_forward.9}
  #allocation0 [shape = 'u32[]', space=smem, size = 0x4, offset = 0x4, fixed_abs, tag = 'smem constant byte address 0x4 - core index']
  #allocation1 [shape = 'u32[72,128]{1,0:T(1,128)}', space=vmem, size = 0x9000, scoped, tag = 'internal scratch']
  #allocation2 [shape = 'f32[1,1]{1,0:T(1,128)S(1)}', space=vmem, size = 0x200, scoped, tag = 'scoped memory for discriminator_forward.9']
  %s0 = inlined_call_operand.vmem [shape: bf16[8,128], index: 0, kind: input, shape index: {}]
  %s1 = inlined_call_operand.vmem [shape: f32[1,128], index: 1, kind: input, shape index: {}]
  %s2 = inlined_call_operand.<no memory space> [shape: f32[1,1], index: 2, kind: input, shape index: {}]
  %s3 = inlined_call_operand.vmem [shape: f32[8,1], index: 3, kind: output, shape index: {}]
  %s4 = sld [smem:[#allocation0]]
  $region22: #{discriminator_forward.9} parent=0
    _
  %s6 = ssub.s32 1, %s4
  %s7 = scalar_select 0, %s6, %s4
  %v8 = vstv %s2
  %9 = vst [vmem:[#allocation2] sm:$0x1] %v8
  // Predicated region
  $region2: #{discriminator_forward.9} parent=0 // pred_check
    _
  $region3: #{discriminator_forward.9} parent=0 // pred_check_branch
    %11 = sbr.rel (0) target = $region5
  $region4: #{discriminator_forward.9} parent=0 // pred_region
    _
  $region5: #{discriminator_forward.9} parent=0 // pred_fallthru
    _
  // Predicated region
  $region6: #{discriminator_forward.9} parent=0 // pred_check
    _
  $region7: #{discriminator_forward.9} parent=0 // pred_check_branch
    %13 = sbr.rel (0) target = $region9
  $region8: #{discriminator_forward.9} parent=0 // pred_region
    _
  $region9: #{discriminator_forward.9} parent=0 // pred_fallthru
    _
  // Predicated region
  $region10: #{discriminator_forward.9} parent=0 // pred_check
    _
  $region11: #{discriminator_forward.9} parent=0 // pred_check_branch
    %15 = sbr.rel (0) target = $region13
  $region12: #{discriminator_forward.9} parent=0 // pred_region
    _
  $region13: #{discriminator_forward.9} parent=0 // pred_fallthru
    _
  %v16 = vld [vmem:[%s0] sm:$0xf]
  %v17 = vunpack.c.l.bf16 %v16
  %v18 = vld [vmem:[%s1] sm:$0x1]
  %v20 = vperm.slane %v18, 0
  %v22 = vmul.f32 %v17, %v20
  %23 = vadd.xlane.f32.xlu0 %v22
  %v24 = vpop.xlane.xlu0 %23
  %v25 = vld [vmem:[#allocation2] sm:$0x1]
  %v27 = vperm.slane %v25, 0
  %v29 = vadd.f32 %v24, %v27
  %v30 = vand.u32 2147483647, %v29
  %v31 = vsub.f32 0.0, %v30
  %v32 = vmul.f32 %v31, 1.442695
  %v33 = vpow.pop %v32
  %vm34 = vcmp.ge.f32.partialorder %v29, 0.0
  %v35 = vadd.f32 %v33, 1.0
  %v36 = vrcp.pop %v35
  %v37 = vmul.f32 %v35, %v36
  %v38 = vsub.f32 1.0, %v37
  %v39 = vmul.f32 %v36, %v38
  %v40 = vadd.f32 %v36, %v39
  %vm41 = vweird.f32 %v35
  %vm42 = vweird.f32 %v36
  %vm43 = vmor %vm41, %vm42
  %v44 = vsel %vm43, %v36, %v40
  %v45 = vand.u32 2147483647, %v35
  %vm46 = vcmp.eq.f32.partialorder %v45, 8.507059e+37
  %v47 = vand.u32 %v35, 2147483648
  %v48 = vor.u32 1.1754944e-38, %v47
  %v49 = vsel %vm46, %v48, %v44
  %v50 = vmul.f32 1.0, %v49
  %v51 = vmul.f32 %v33, %v49
  %v52 = vsel %vm34, %v50, %v51
  %vm53 = vcmask 7168
  %54 = vst.msk [vmem:[%s3] sm:$0xff] %vm53, %v52
  // Predicated region
  $region14: #{discriminator_forward.9} parent=0 // pred_check
    _
  $region15: #{discriminator_forward.9} parent=0 // pred_check_branch
    %56 = sbr.rel (0) target = $region17
  $region16: #{discriminator_forward.9} parent=0 // pred_region
    _
  $region17: #{discriminator_forward.9} parent=0 // pred_fallthru
    _
  // Predicated region
  $region18: #{discriminator_forward.9} parent=0 // pred_check
    _
  $region19: #{discriminator_forward.9} parent=0 // pred_check_branch
    %58 = sbr.rel (0) target = $region21
  $region20: #{discriminator_forward.9} parent=0 // pred_region
    _
  $region21: #{discriminator_forward.9} parent=0 // pred_fallthru
    _

</llo_original>
